<compile_context>
chip_gen: v5e
topology: v5e:2x2
jax: 0.10.0
libtpu: 0.0.40
codegen_flags: <defaults>
</compile_context>

<pallas_src>
import jax
import jax.numpy as jnp
from jax.experimental import pallas as pl
from jax.experimental.pallas import tpu as pltpu


# ----------------------------- Pallas kernels ------------------------------

def _conv_bn_relu_kernel(x_ref, w_ref, shift_ref, o_ref):
    """o = relu(w @ x + shift).

    w: (Cout, K) bf16 with BN scale pre-folded; x: (K, TM) bf16 im2col patches;
    shift: (Cout, 1) f32 folded conv-bias/BN shift.  Output tile (Cout, TM)
    keeps TM (multiple of 128) on the lane axis -> unmasked, lane-dense stores.
    """
    acc = jnp.dot(w_ref[...], x_ref[...], preferred_element_type=jnp.float32)
    o_ref[...] = jnp.maximum(acc + shift_ref[...], 0.0)


def _fc_head_kernel(x_ref, w1_ref, b1_ref, w2_ref, b2_ref, o_ref):
    """o = relu(x @ w1 + b1) @ w2 + b2   (fc1 + ReLU + fc2, single block)."""
    h = jnp.dot(x_ref[...], w1_ref[...], preferred_element_type=jnp.float32)
    h = jnp.maximum(h + b1_ref[...], 0.0)
    o_ref[...] = jnp.dot(h, w2_ref[...], preferred_element_type=jnp.float32) + b2_ref[...]


# ------------------------------ layer wrappers ------------------------------

def _round_up(x, m):
    return ((x + m - 1) // m) * m


def conv_bn_relu(x_cf, w_ck, shift, tm=512):
    """Conv2d(k=3, s=2, p=0) + BatchNorm(eval, folded) + ReLU.

    x_cf:  (Cin, N, H, W) f32 activations (channels-first).
    w_ck:  (Cout, Cin*9) bf16, K order (cin, kh, kw), BN scale folded in.
    shift: (Cout,) f32 folded conv-bias + BN shift.
    Returns (Cout, N, OH, OW) f32.
    """
    Cin, N, H, W = x_cf.shape
    OH = (H - 3) // 2 + 1
    OW = (W - 3) // 2 + 1
    Cout, K = w_ck.shape
    M = N * OH * OW

    # im2col (plain-JAX layout glue): patch K order = (cin, kh, kw).
    parts = [x_cf[:, :, kh:kh + 2 * OH - 1:2, kw:kw + 2 * OW - 1:2]
             for kh in range(3) for kw in range(3)]
    patches = jnp.stack(parts, axis=1)                  # (Cin, 9, N, OH, OW)
    xm = patches.reshape(K, M).astype(jnp.bfloat16)     # (K, M)

    # Tile over M; pad so every block is full width (no ragged / masked edge).
    tm = min(tm, _round_up(M, 128))
    num_m = pl.cdiv(M, tm)
    m_pad = num_m * tm
    if m_pad != M:
        xm = jnp.pad(xm, ((0, 0), (0, m_pad - M)))

    out = pl.pallas_call(
        _conv_bn_relu_kernel,
        out_shape=jax.ShapeDtypeStruct((Cout, m_pad), jnp.float32),
        grid=(num_m,),
        in_specs=[
            pl.BlockSpec((K, tm), lambda i: (0, i)),
            pl.BlockSpec((Cout, K), lambda i: (0, 0)),
            pl.BlockSpec((Cout, 1), lambda i: (0, 0)),
        ],
        out_specs=pl.BlockSpec((Cout, tm), lambda i: (0, i)),
        compiler_params=pltpu.CompilerParams(
            dimension_semantics=("parallel",)),
    )(xm, w_ck, shift.reshape(Cout, 1))

    return out[:, :M].reshape(Cout, N, OH, OW)


def maxpool2(x):
    """2x2 max pool, stride 2, floor mode, on (C, N, H, W).  Plain-JAX glue so
    XLA fuses the 4-way max with the next layer's im2col gather."""
    C, N, H, W = x.shape
    PH, PW = H // 2, W // 2
    return jnp.maximum(
        jnp.maximum(x[:, :, 0:2 * PH:2, 0:2 * PW:2], x[:, :, 0:2 * PH:2, 1:2 * PW:2]),
        jnp.maximum(x[:, :, 1:2 * PH:2, 0:2 * PW:2], x[:, :, 1:2 * PH:2, 1:2 * PW:2]))


def fc_head(feat, w1, b1, w2, b2):
    """feat: (N, 576) -> relu(fc1) -> fc2 -> (N, 2), one fused Pallas kernel."""
    N, K1 = feat.shape
    H1 = w1.shape[1]
    O2 = w2.shape[1]
    return pl.pallas_call(
        _fc_head_kernel,
        out_shape=jax.ShapeDtypeStruct((N, O2), jnp.float32),
        grid=(1,),
        in_specs=[
            pl.BlockSpec((N, K1), lambda i: (0, 0)),
            pl.BlockSpec((K1, H1), lambda i: (0, 0)),
            pl.BlockSpec((1, H1), lambda i: (0, 0)),
            pl.BlockSpec((H1, O2), lambda i: (0, 0)),
            pl.BlockSpec((1, O2), lambda i: (0, 0)),
        ],
        out_specs=pl.BlockSpec((N, O2), lambda i: (0, 0)),
    )(feat, w1, b1.reshape(1, H1), w2, b2.reshape(1, O2))


# ------------------------------ parameter setup -----------------------------

def _conv_layer_params(key, cin, cout, eps=1e-5):
    """Deterministic synthetic params mimicking Conv2d+BatchNorm2d (eval mode)."""
    kw_, kb_ = jax.random.split(key)
    fan_in = cin * 9
    bound = 1.0 / jnp.sqrt(fan_in)
    w_torch = jax.random.uniform(kw_, (cout, cin, 3, 3), jnp.float32, -bound, bound)
    b_conv = jax.random.uniform(kb_, (cout,), jnp.float32, -bound, bound)
    # BN defaults (eval): gamma=1, beta=0, running_mean=0, running_var=1.
    gamma = jnp.ones((cout,), jnp.float32)
    beta = jnp.zeros((cout,), jnp.float32)
    mean = jnp.zeros((cout,), jnp.float32)
    var = jnp.ones((cout,), jnp.float32)
    scale = gamma / jnp.sqrt(var + eps)
    shift = beta + (b_conv - mean) * scale               # folded conv bias + BN shift
    # Fold BN scale into the conv weights; flatten (Cout,Cin,3,3) -> (Cout, Cin*9)
    # with K order (cin, kh, kw) matching the im2col patch layout.
    w_ck = (w_torch * scale[:, None, None, None]).reshape(cout, cin * 9)
    return w_ck.astype(jnp.bfloat16), shift.astype(jnp.float32)


def _fc_params(key, fan_in, fan_out):
    kw_, kb_ = jax.random.split(key)
    bound = 1.0 / jnp.sqrt(fan_in)
    w_torch = jax.random.uniform(kw_, (fan_out, fan_in), jnp.float32, -bound, bound)
    b = jax.random.uniform(kb_, (fan_out,), jnp.float32, -bound, bound)
    return w_torch.T, b                                  # stored as (fan_in, fan_out)


def init_params(key):
    k1, k2, k3, k4, k5 = jax.random.split(key, 5)
    return {
        "l1": _conv_layer_params(k1, 3, 16),
        "l2": _conv_layer_params(k2, 16, 32),
        "l3": _conv_layer_params(k3, 32, 64),
        "fc1": _fc_params(k4, 3 * 3 * 64, 10),
        "fc2": _fc_params(k5, 10, 2),
    }


# --------------------------------- forward ----------------------------------

@jax.jit
def cnn_forward(x_nchw, params):
    # NCHW -> channels-first "CNHW" activation layout (one cheap transpose).
    x = jnp.transpose(x_nchw, (1, 0, 2, 3)).astype(jnp.float32)
    for name in ("l1", "l2", "l3"):
        w_ck, shift = params[name]
        x = conv_bn_relu(x, w_ck, shift)
        x = maxpool2(x)
    C, N, PH, PW = x.shape
    # flatten in PyTorch (C, H, W) order, matching out.view(N, -1) on NCHW.
    feat = jnp.transpose(x, (1, 0, 2, 3)).reshape(N, C * PH * PW)   # (N, 576)
    w1, b1 = params["fc1"]
    w2, b2 = params["fc2"]
    return fc_head(feat, w1, b1, w2, b2)


if __name__ == "__main__":
    key = jax.random.PRNGKey(0)
    kx, kp = jax.random.split(key)
    # fc1 expects 3*3*64 features => input spatial must be 224
    # (224 -> 111 -> 55 -> 27 -> 13 -> 6 -> 3); batch kept small.
    x = jax.random.normal(kx, (2, 3, 224, 224), dtype=jnp.float32)
    params = init_params(kp)

    out = cnn_forward(x, params)
    jax.block_until_ready(out)
    assert out.shape == (2, 2) and out.dtype == jnp.float32
    print("KERNEL_OK")
</pallas_src>

<mosaic_0001>
module attributes {stable_mosaic.version = 11 : i64} {
  func.func @_conv_bn_relu_kernel(%arg0: i32, %arg1: memref<27x512xbf16, #tpu.memory_space<vmem>>, %arg2: memref<16x27xbf16, #tpu.memory_space<vmem>>, %arg3: memref<16x1xf32, #tpu.memory_space<vmem>>, %arg4: memref<16x512xf32, #tpu.memory_space<vmem>>) attributes {dimension_semantics = [#tpu.dimension_semantics<parallel>], iteration_bounds = array<i64: 49>, scalar_prefetch = 0 : i64, scratch_operands = 0 : i64, tpu.core_type = #tpu.core_type<tc>, window_params = [{transform_indices = @transform_0, window_bounds = array<i64: 27, 512>}, {pipeline_mode = #tpu.pipeline_mode<synchronous>, transform_indices = @transform_1, window_bounds = array<i64: 16, 27>}, {pipeline_mode = #tpu.pipeline_mode<synchronous>, transform_indices = @transform_2, window_bounds = array<i64: 16, 1>}, {transform_indices = @transform_3, window_bounds = array<i64: 16, 512>}]} {
    %c0 = arith.constant 0 : index
    %c0_0 = arith.constant 0 : index
    %0 = vector.load %arg2[%c0, %c0_0] : memref<16x27xbf16, #tpu.memory_space<vmem>>, vector<16x27xbf16>
    %c0_1 = arith.constant 0 : index
    %c0_2 = arith.constant 0 : index
    %1 = vector.load %arg1[%c0_1, %c0_2] : memref<27x512xbf16, #tpu.memory_space<vmem>>, vector<27x512xbf16>
    %cst = arith.constant dense<0.000000e+00> : vector<16x512xf32>
    %2 = tpu.matmul %0, %1, %cst {dimension_numbers = #tpu.dot_dimension_numbers<[1], [0], [0], [1], [0, 0, 1, 1], [], []>} : vector<16x27xbf16>, vector<27x512xbf16>, vector<16x512xf32> -> vector<16x512xf32>
    %c0_3 = arith.constant 0 : index
    %c0_4 = arith.constant 0 : index
    %3 = vector.load %arg3[%c0_3, %c0_4] : memref<16x1xf32, #tpu.memory_space<vmem>>, vector<16x1xf32>
    %4 = vector.broadcast %3 : vector<16x1xf32> to vector<16x512xf32>
    %5 = arith.addf %2, %4 : vector<16x512xf32>
    %cst_5 = arith.constant 0.000000e+00 : f32
    %6 = vector.broadcast %cst_5 : f32 to vector<16x512xf32>
    %7 = arith.maximumf %5, %6 : vector<16x512xf32>
    %c0_6 = arith.constant 0 : index
    %c0_7 = arith.constant 0 : index
    %8 = vector.load %arg4[%c0_6, %c0_7] : memref<16x512xf32, #tpu.memory_space<vmem>>, vector<16x512xf32>
    tpu.vector_store %arg4[%c0_6, %c0_7], %7 {strides = array<i32>} : memref<16x512xf32, #tpu.memory_space<vmem>>, vector<16x512xf32>,
    return
  }
  func.func @transform_0(%arg0: i32) -> (i32, i32) {
    %c0_i32 = arith.constant 0 : i32
    %c0_i32_0 = arith.constant 0 : i32
    return %c0_i32, %arg0 : i32, i32
  }
  func.func @transform_1(%arg0: i32) -> (i32, i32) {
    %c0_i32 = arith.constant 0 : i32
    %c0_i32_0 = arith.constant 0 : i32
    %c0_i32_1 = arith.constant 0 : i32
    return %c0_i32, %c0_i32_0 : i32, i32
  }
  func.func @transform_2(%arg0: i32) -> (i32, i32) {
    %c0_i32 = arith.constant 0 : i32
    %c0_i32_0 = arith.constant 0 : i32
    %c0_i32_1 = arith.constant 0 : i32
    return %c0_i32, %c0_i32_0 : i32, i32
  }
  func.func @transform_3(%arg0: i32) -> (i32, i32) {
    %c0_i32 = arith.constant 0 : i32
    %c0_i32_0 = arith.constant 0 : i32
    return %c0_i32, %arg0 : i32, i32
  }
}

module attributes {stable_mosaic.version = 11 : i64} {
  func.func @_conv_bn_relu_kernel(%arg0: i32, %arg1: memref<144x512xbf16, #tpu.memory_space<vmem>>, %arg2: memref<32x144xbf16, #tpu.memory_space<vmem>>, %arg3: memref<32x1xf32, #tpu.memory_space<vmem>>, %arg4: memref<32x512xf32, #tpu.memory_space<vmem>>) attributes {dimension_semantics = [#tpu.dimension_semantics<parallel>], iteration_bounds = array<i64: 3>, scalar_prefetch = 0 : i64, scratch_operands = 0 : i64, tpu.core_type = #tpu.core_type<tc>, window_params = [{transform_indices = @transform_0, window_bounds = array<i64: 144, 512>}, {pipeline_mode = #tpu.pipeline_mode<synchronous>, transform_indices = @transform_1, window_bounds = array<i64: 32, 144>}, {pipeline_mode = #tpu.pipeline_mode<synchronous>, transform_indices = @transform_2, window_bounds = array<i64: 32, 1>}, {transform_indices = @transform_3, window_bounds = array<i64: 32, 512>}]} {
    %c0 = arith.constant 0 : index
    %c0_0 = arith.constant 0 : index
    %0 = vector.load %arg2[%c0, %c0_0] : memref<32x144xbf16, #tpu.memory_space<vmem>>, vector<32x144xbf16>
    %c0_1 = arith.constant 0 : index
    %c0_2 = arith.constant 0 : index
    %1 = vector.load %arg1[%c0_1, %c0_2] : memref<144x512xbf16, #tpu.memory_space<vmem>>, vector<144x512xbf16>
    %cst = arith.constant dense<0.000000e+00> : vector<32x512xf32>
    %2 = tpu.matmul %0, %1, %cst {dimension_numbers = #tpu.dot_dimension_numbers<[1], [0], [0], [1], [0, 0, 1, 1], [], []>} : vector<32x144xbf16>, vector<144x512xbf16>, vector<32x512xf32> -> vector<32x512xf32>
    %c0_3 = arith.constant 0 : index
    %c0_4 = arith.constant 0 : index
    %3 = vector.load %arg3[%c0_3, %c0_4] : memref<32x1xf32, #tpu.memory_space<vmem>>, vector<32x1xf32>
    %4 = vector.broadcast %3 : vector<32x1xf32> to vector<32x512xf32>
    %5 = arith.addf %2, %4 : vector<32x512xf32>
    %cst_5 = arith.constant 0.000000e+00 : f32
    %6 = vector.broadcast %cst_5 : f32 to vector<32x512xf32>
    %7 = arith.maximumf %5, %6 : vector<32x512xf32>
    %c0_6 = arith.constant 0 : index
    %c0_7 = arith.constant 0 : index
    %8 = vector.load %arg4[%c0_6, %c0_7] : memref<32x512xf32, #tpu.memory_space<vmem>>, vector<32x512xf32>
    tpu.vector_store %arg4[%c0_6, %c0_7], %7 {strides = array<i32>} : memref<32x512xf32, #tpu.memory_space<vmem>>, vector<32x512xf32>,
    return
  }
  func.func @transform_0(%arg0: i32) -> (i32, i32) {
    %c0_i32 = arith.constant 0 : i32
    %c0_i32_0 = arith.constant 0 : i32
    return %c0_i32, %arg0 : i32, i32
  }
  func.func @transform_1(%arg0: i32) -> (i32, i32) {
    %c0_i32 = arith.constant 0 : i32
    %c0_i32_0 = arith.constant 0 : i32
    %c0_i32_1 = arith.constant 0 : i32
    return %c0_i32, %c0_i32_0 : i32, i32
  }
  func.func @transform_2(%arg0: i32) -> (i32, i32) {
    %c0_i32 = arith.constant 0 : i32
    %c0_i32_0 = arith.constant 0 : i32
    %c0_i32_1 = arith.constant 0 : i32
    return %c0_i32, %c0_i32_0 : i32, i32
  }
  func.func @transform_3(%arg0: i32) -> (i32, i32) {
    %c0_i32 = arith.constant 0 : i32
    %c0_i32_0 = arith.constant 0 : i32
    return %c0_i32, %arg0 : i32, i32
  }
}

module attributes {stable_mosaic.version = 11 : i64} {
  func.func @_conv_bn_relu_kernel(%arg0: i32, %arg1: memref<288x128xbf16, #tpu.memory_space<vmem>>, %arg2: memref<64x288xbf16, #tpu.memory_space<vmem>>, %arg3: memref<64x1xf32, #tpu.memory_space<vmem>>, %arg4: memref<64x128xf32, #tpu.memory_space<vmem>>) attributes {dimension_semantics = [#tpu.dimension_semantics<parallel>], iteration_bounds = array<i64: 1>, scalar_prefetch = 0 : i64, scratch_operands = 0 : i64, tpu.core_type = #tpu.core_type<tc>, window_params = [{transform_indices = @transform_0, window_bounds = array<i64: 288, 128>}, {pipeline_mode = #tpu.pipeline_mode<synchronous>, transform_indices = @transform_1, window_bounds = array<i64: 64, 288>}, {pipeline_mode = #tpu.pipeline_mode<synchronous>, transform_indices = @transform_2, window_bounds = array<i64: 64, 1>}, {transform_indices = @transform_3, window_bounds = array<i64: 64, 128>}]} {
    %c0 = arith.constant 0 : index
    %c0_0 = arith.constant 0 : index
    %0 = vector.load %arg2[%c0, %c0_0] : memref<64x288xbf16, #tpu.memory_space<vmem>>, vector<64x288xbf16>
    %c0_1 = arith.constant 0 : index
    %c0_2 = arith.constant 0 : index
    %1 = vector.load %arg1[%c0_1, %c0_2] : memref<288x128xbf16, #tpu.memory_space<vmem>>, vector<288x128xbf16>
    %cst = arith.constant dense<0.000000e+00> : vector<64x128xf32>
    %2 = tpu.matmul %0, %1, %cst {dimension_numbers = #tpu.dot_dimension_numbers<[1], [0], [0], [1], [0, 0, 1, 1], [], []>} : vector<64x288xbf16>, vector<288x128xbf16>, vector<64x128xf32> -> vector<64x128xf32>
    %c0_3 = arith.constant 0 : index
    %c0_4 = arith.constant 0 : index
    %3 = vector.load %arg3[%c0_3, %c0_4] : memref<64x1xf32, #tpu.memory_space<vmem>>, vector<64x1xf32>
    %4 = vector.broadcast %3 : vector<64x1xf32> to vector<64x128xf32>
    %5 = arith.addf %2, %4 : vector<64x128xf32>
    %cst_5 = arith.constant 0.000000e+00 : f32
    %6 = vector.broadcast %cst_5 : f32 to vector<64x128xf32>
    %7 = arith.maximumf %5, %6 : vector<64x128xf32>
    %c0_6 = arith.constant 0 : index
    %c0_7 = arith.constant 0 : index
    %8 = vector.load %arg4[%c0_6, %c0_7] : memref<64x128xf32, #tpu.memory_space<vmem>>, vector<64x128xf32>
    tpu.vector_store %arg4[%c0_6, %c0_7], %7 {strides = array<i32>} : memref<64x128xf32, #tpu.memory_space<vmem>>, vector<64x128xf32>,
    return
  }
  func.func @transform_0(%arg0: i32) -> (i32, i32) {
    %c0_i32 = arith.constant 0 : i32
    %c0_i32_0 = arith.constant 0 : i32
    return %c0_i32, %arg0 : i32, i32
  }
  func.func @transform_1(%arg0: i32) -> (i32, i32) {
    %c0_i32 = arith.constant 0 : i32
    %c0_i32_0 = arith.constant 0 : i32
    %c0_i32_1 = arith.constant 0 : i32
    return %c0_i32, %c0_i32_0 : i32, i32
  }
  func.func @transform_2(%arg0: i32) -> (i32, i32) {
    %c0_i32 = arith.constant 0 : i32
    %c0_i32_0 = arith.constant 0 : i32
    %c0_i32_1 = arith.constant 0 : i32
    return %c0_i32, %c0_i32_0 : i32, i32
  }
  func.func @transform_3(%arg0: i32) -> (i32, i32) {
    %c0_i32 = arith.constant 0 : i32
    %c0_i32_0 = arith.constant 0 : i32
    return %c0_i32, %arg0 : i32, i32
  }
}

module attributes {stable_mosaic.version = 11 : i64} {
  func.func @_fc_head_kernel(%arg0: i32, %arg1: memref<2x576xf32, #tpu.memory_space<vmem>>, %arg2: memref<576x10xf32, #tpu.memory_space<vmem>>, %arg3: memref<1x10xf32, #tpu.memory_space<vmem>>, %arg4: memref<10x2xf32, #tpu.memory_space<vmem>>, %arg5: memref<1x2xf32, #tpu.memory_space<vmem>>, %arg6: memref<2x2xf32, #tpu.memory_space<vmem>>) attributes {dimension_semantics = [#tpu.dimension_semantics<arbitrary>], iteration_bounds = array<i64: 1>, scalar_prefetch = 0 : i64, scratch_operands = 0 : i64, tpu.core_type = #tpu.core_type<tc>, window_params = [{pipeline_mode = #tpu.pipeline_mode<synchronous>, transform_indices = @transform_0, window_bounds = array<i64: 2, 576>}, {pipeline_mode = #tpu.pipeline_mode<synchronous>, transform_indices = @transform_1, window_bounds = array<i64: 576, 10>}, {pipeline_mode = #tpu.pipeline_mode<synchronous>, transform_indices = @transform_2, window_bounds = array<i64: 1, 10>}, {pipeline_mode = #tpu.pipeline_mode<synchronous>, transform_indices = @transform_3, window_bounds = array<i64: 10, 2>}, {pipeline_mode = #tpu.pipeline_mode<synchronous>, transform_indices = @transform_4, window_bounds = array<i64: 1, 2>}, {pipeline_mode = #tpu.pipeline_mode<synchronous>, transform_indices = @transform_5, window_bounds = array<i64: 2, 2>}]} {
    %c0 = arith.constant 0 : index
    %c0_0 = arith.constant 0 : index
    %0 = vector.load %arg1[%c0, %c0_0] : memref<2x576xf32, #tpu.memory_space<vmem>>, vector<2x576xf32>
    %c0_1 = arith.constant 0 : index
    %c0_2 = arith.constant 0 : index
    %1 = vector.load %arg2[%c0_1, %c0_2] : memref<576x10xf32, #tpu.memory_space<vmem>>, vector<576x10xf32>
    %cst = arith.constant dense<0.000000e+00> : vector<2x10xf32>
    %2 = tpu.matmul %0, %1, %cst {dimension_numbers = #tpu.dot_dimension_numbers<[1], [0], [0], [1], [0, 0, 1, 1], [], []>} : vector<2x576xf32>, vector<576x10xf32>, vector<2x10xf32> -> vector<2x10xf32>
    %c0_3 = arith.constant 0 : index
    %c0_4 = arith.constant 0 : index
    %3 = vector.load %arg3[%c0_3, %c0_4] : memref<1x10xf32, #tpu.memory_space<vmem>>, vector<1x10xf32>
    %4 = vector.broadcast %3 : vector<1x10xf32> to vector<2x10xf32>
    %5 = arith.addf %2, %4 : vector<2x10xf32>
    %cst_5 = arith.constant 0.000000e+00 : f32
    %6 = vector.broadcast %cst_5 : f32 to vector<2x10xf32>
    %7 = arith.maximumf %5, %6 : vector<2x10xf32>
    %c0_6 = arith.constant 0 : index
    %c0_7 = arith.constant 0 : index
    %8 = vector.load %arg4[%c0_6, %c0_7] : memref<10x2xf32, #tpu.memory_space<vmem>>, vector<10x2xf32>
    %cst_8 = arith.constant dense<0.000000e+00> : vector<2x2xf32>
    %9 = tpu.matmul %7, %8, %cst_8 {dimension_numbers = #tpu.dot_dimension_numbers<[1], [0], [0], [1], [0, 0, 1, 1], [], []>} : vector<2x10xf32>, vector<10x2xf32>, vector<2x2xf32> -> vector<2x2xf32>
    %c0_9 = arith.constant 0 : index
    %c0_10 = arith.constant 0 : index
    %10 = vector.load %arg5[%c0_9, %c0_10] : memref<1x2xf32, #tpu.memory_space<vmem>>, vector<1x2xf32>
    %11 = vector.broadcast %10 : vector<1x2xf32> to vector<2x2xf32>
    %12 = arith.addf %9, %11 : vector<2x2xf32>
    %c0_11 = arith.constant 0 : index
    %c0_12 = arith.constant 0 : index
    %13 = vector.load %arg6[%c0_11, %c0_12] : memref<2x2xf32, #tpu.memory_space<vmem>>, vector<2x2xf32>
    tpu.vector_store %arg6[%c0_11, %c0_12], %12 {strides = array<i32>} : memref<2x2xf32, #tpu.memory_space<vmem>>, vector<2x2xf32>,
    return
  }
  func.func @transform_0(%arg0: i32) -> (i32, i32) {
    %c0_i32 = arith.constant 0 : i32
    %c0_i32_0 = arith.constant 0 : i32
    %c0_i32_1 = arith.constant 0 : i32
    return %c0_i32, %c0_i32_0 : i32, i32
  }
  func.func @transform_1(%arg0: i32) -> (i32, i32) {
    %c0_i32 = arith.constant 0 : i32
    %c0_i32_0 = arith.constant 0 : i32
    %c0_i32_1 = arith.constant 0 : i32
    return %c0_i32, %c0_i32_0 : i32, i32
  }
  func.func @transform_2(%arg0: i32) -> (i32, i32) {
    %c0_i32 = arith.constant 0 : i32
    %c0_i32_0 = arith.constant 0 : i32
    %c0_i32_1 = arith.constant 0 : i32
    return %c0_i32, %c0_i32_0 : i32, i32
  }
  func.func @transform_3(%arg0: i32) -> (i32, i32) {
    %c0_i32 = arith.constant 0 : i32
    %c0_i32_0 = arith.constant 0 : i32
    %c0_i32_1 = arith.constant 0 : i32
    return %c0_i32, %c0_i32_0 : i32, i32
  }
  func.func @transform_4(%arg0: i32) -> (i32, i32) {
    %c0_i32 = arith.constant 0 : i32
    %c0_i32_0 = arith.constant 0 : i32
    %c0_i32_1 = arith.constant 0 : i32
    return %c0_i32, %c0_i32_0 : i32, i32
  }
  func.func @transform_5(%arg0: i32) -> (i32, i32) {
    %c0_i32 = arith.constant 0 : i32
    %c0_i32_0 = arith.constant 0 : i32
    %c0_i32_1 = arith.constant 0 : i32
    return %c0_i32, %c0_i32_0 : i32, i32
  }
}

</mosaic_0001>

<llo_original>
// kernel: cnn_forward.4
$region0: #{cnn_forward.4}
  #allocation0 [shape = 'u32[]', space=smem, size = 0x4, offset = 0x4, fixed_abs, tag = 'smem constant byte address 0x4 - core index']
  #allocation1 [shape = 'u32[72,128]{1,0:T(1,128)}', space=vmem, size = 0x9000, scoped, tag = 'internal scratch']
  %s0 = inlined_call_operand.vmem [shape: bf16[27,25088], index: 0, kind: input, shape index: {}]
  %s1 = inlined_call_operand.vmem [shape: bf16[16,27], index: 1, kind: input, shape index: {}]
  %s2 = inlined_call_operand.vmem [shape: f32[16,1], index: 2, kind: input, shape index: {}]
  %s3 = inlined_call_operand.vmem [shape: f32[16,25088], index: 3, kind: output, shape index: {}]
  %s4 = sld [smem:[#allocation0]]
  $region87: #{cnn_forward.4} parent=0
    _
  %s6 = ssub.s32 1, %s4
  %s7 = scalar_select 0, %s6, %s4
  $region1: #{cnn_forward.4} parent=0
    #allocation2 [shape = 'u8[65536]{0}', space=vmem, size = 0x10000, scoped, tag = 'input window, operand 0']
    #allocation3 [shape = 'u8[65536]{0}', space=vmem, size = 0x10000, scoped, tag = 'output window, operand 0']
    loop: start=0, step=1, limit=51
    $region2: #{cnn_forward.4} parent=1 // loop_pre_header
      _
    $region3: #{cnn_forward.4} parent=1 // loop_header
      %s9 = sphi 0, %s13
      %p10 = scmp.ge.s32.totalorder %s9, 51
      %s19 = sphi 0, %s21
      %s22 = sphi 0, %s19
      %s23 = sphi 0, %s22
      %s39 = sphi 0, %s23
      %s43 = sphi 0, %s43
      %s45 = sphi 0, %s43
      %s46 = sphi 0, %s45
      %s60 = sphi 0, %s46
      %s64 = sphi 0, %s64
      %s66 = sphi 0, %s64
      %s67 = sphi 0, %s66
      %s81 = sphi 0, %s67
      %s87 = sphi 0, %s89
      %s90 = sphi 0, %s87
      %s91 = sphi 0, %s90
      %s107 = sphi 0, %s91
    $region4: #{cnn_forward.4} parent=1 // loop_header_branch
      %12 = sbr.rel (%p10) target = $region8
    $region5: #{cnn_forward.4} parent=1 // loop_body
      %s14 = ssub.s32 %s9, 1
      %s15 = ssub.s32 %s9, 2
      %s16 = sadd.s32 %s9, 1
      %s17 = ssub.s32 %s9, %s16
      %p18 = scmp.eq.s32.totalorder %s17, 0
      %s20 = sadd.s32 %s19, 1
      %s21 = scalar_select %p18, %s19, %s20
      %p24 = pneg %p18
      %p25 = scmp.eq.s32.totalorder %s9, 48
      %p26 = por %p24, %p25
      %p27 = scmp.ne.s32.totalorder %s19, %s22
      %p28 = scmp.eq.s32.totalorder %s9, 0
      %p29 = por %p27, %p28
      %p30 = scmp.ne.s32.totalorder %s19, %s22
      %p31 = scmp.eq.s32.totalorder %s14, 48
      %p32 = por %p30, %p31
      %p33 = scmp.ne.s32.totalorder %s22, %s23
      %p34 = scmp.eq.s32.totalorder %s14, 0
      %p35 = por %p33, %p34
      %p36 = scmp.ne.s32.totalorder %s22, %s23
      %p37 = scmp.eq.s32.totalorder %s15, 48
      %p38 = por %p36, %p37
      %p40 = scmp.ne.s32.totalorder %s23, %s39
      %p41 = scmp.eq.s32.totalorder %s15, 0
      %p42 = por %p40, %p41
      %s44 = sadd.s32 %s43, 1
      %p47 = scmp.eq.s32.totalorder %s9, 48
      %p48 = scmp.ne.s32.totalorder %s43, %s45
      %p49 = scmp.eq.s32.totalorder %s9, 0
      %p50 = por %p48, %p49
      %p51 = scmp.ne.s32.totalorder %s43, %s45
      %p52 = scmp.eq.s32.totalorder %s14, 48
      %p53 = por %p51, %p52
      %p54 = scmp.ne.s32.totalorder %s45, %s46
      %p55 = scmp.eq.s32.totalorder %s14, 0
      %p56 = por %p54, %p55
      %p57 = scmp.ne.s32.totalorder %s45, %s46
      %p58 = scmp.eq.s32.totalorder %s15, 48
      %p59 = por %p57, %p58
      %p61 = scmp.ne.s32.totalorder %s46, %s60
      %p62 = scmp.eq.s32.totalorder %s15, 0
      %p63 = por %p61, %p62
      %s65 = sadd.s32 %s64, 1
      %p68 = scmp.eq.s32.totalorder %s9, 48
      %p69 = scmp.ne.s32.totalorder %s64, %s66
      %p70 = scmp.eq.s32.totalorder %s9, 0
      %p71 = por %p69, %p70
      %p72 = scmp.ne.s32.totalorder %s64, %s66
      %p73 = scmp.eq.s32.totalorder %s14, 48
      %p74 = por %p72, %p73
      %p75 = scmp.ne.s32.totalorder %s66, %s67
      %p76 = scmp.eq.s32.totalorder %s14, 0
      %p77 = por %p75, %p76
      %p78 = scmp.ne.s32.totalorder %s66, %s67
      %p79 = scmp.eq.s32.totalorder %s15, 48
      %p80 = por %p78, %p79
      %p82 = scmp.ne.s32.totalorder %s67, %s81
      %p83 = scmp.eq.s32.totalorder %s15, 0
      %p84 = por %p82, %p83
      %s85 = ssub.s32 %s9, %s16
      %p86 = scmp.eq.s32.totalorder %s85, 0
      %s88 = sadd.s32 %s87, 1
      %s89 = scalar_select %p86, %s87, %s88
      %p92 = pneg %p86
      %p93 = scmp.eq.s32.totalorder %s9, 48
      %p94 = por %p92, %p93
      %p95 = scmp.ne.s32.totalorder %s87, %s90
      %p96 = scmp.eq.s32.totalorder %s9, 0
      %p97 = por %p95, %p96
      %p98 = scmp.ne.s32.totalorder %s87, %s90
      %p99 = scmp.eq.s32.totalorder %s14, 48
      %p100 = por %p98, %p99
      %p101 = scmp.ne.s32.totalorder %s90, %s91
      %p102 = scmp.eq.s32.totalorder %s14, 0
      %p103 = por %p101, %p102
      %p104 = scmp.ne.s32.totalorder %s90, %s91
      %p105 = scmp.eq.s32.totalorder %s15, 48
      %p106 = por %p104, %p105
      %p108 = scmp.ne.s32.totalorder %s91, %s107
      %p109 = scmp.eq.s32.totalorder %s15, 0
      %p110 = por %p108, %p109
      %p111 = scmp.le.s32.totalorder 1, %s9
      %p112 = scmp.lt.s32.totalorder %s9, 50
      %p113 = pnand %p111, %p112
      %p114 = pneg %p113
      // Predicated region
      $region9: #{cnn_forward.4} parent=5 // pred_check
        _
      $region10: #{cnn_forward.4} parent=5 // pred_check_branch
        %116 = sbr.rel (%p113) target = $region12
      $region11: #{cnn_forward.4} parent=5 // pred_region
        %s117 = ssub.s32 %s9, 1
        // Predicated region
        $region13: #{cnn_forward.4} parent=11 // pred_check
          %p118 = pneg %p56
        $region14: #{cnn_forward.4} parent=11 // pred_check_branch
          %120 = sbr.rel (%p118) target = $region16
        $region15: #{cnn_forward.4} parent=11 // pred_region
          _
        $region16: #{cnn_forward.4} parent=11 // pred_fallthru
          _
        // Predicated region
        $region17: #{cnn_forward.4} parent=11 // pred_check
          %p121 = pneg %p77
        $region18: #{cnn_forward.4} parent=11 // pred_check_branch
          %123 = sbr.rel (%p121) target = $region20
        $region19: #{cnn_forward.4} parent=11 // pred_region
          _
        $region20: #{cnn_forward.4} parent=11 // pred_fallthru
          _
      $region12: #{cnn_forward.4} parent=5 // pred_fallthru
        _
      %p124 = scmp.lt.s32.totalorder %s9, 49
      // Predicated region
      $region21: #{cnn_forward.4} parent=5 // pred_check
        %p125 = pneg %p124
      $region22: #{cnn_forward.4} parent=5 // pred_check_branch
        %127 = sbr.rel (%p125) target = $region24
      $region23: #{cnn_forward.4} parent=5 // pred_region
        // Predicated region
        $region25: #{cnn_forward.4} parent=23 // pred_check
          %p128 = pneg %p29
        $region26: #{cnn_forward.4} parent=23 // pred_check_branch
          %130 = sbr.rel (%p128) target = $region28
        $region27: #{cnn_forward.4} parent=23 // pred_region
          %s131 = sand.u32 %s19, 1
          %s132 = sand.u32 %s19, 1
          %s133 = smul.addr %s132, 64
          %s134 = scalar_lea.vmem [#allocation2], %s133
          %s135 = smul.u32 4, %s9
          %s136 = smul.addr %s135, 4
          %s137 = scalar_lea.vmem %s0, %s136
          // Predicated region
          $region29: #{cnn_forward.4} parent=27 // pred_check
            _
          $region30: #{cnn_forward.4} parent=27 // pred_check_branch
            %139 = sbr.rel (0) target = $region32
          $region31: #{cnn_forward.4} parent=27 // pred_region
            // Predicated region
            $region33: #{cnn_forward.4} parent=31 // pred_check
              _
            $region34: #{cnn_forward.4} parent=31 // pred_check_branch
              %141 = sbr.rel (0) target = $region36
            $region35: #{cnn_forward.4} parent=31 // pred_region
              loop: start=0, step=1, limit=1
              $region37: #{cnn_forward.4} parent=35 // loop_pre_header
                _
              $region38: #{cnn_forward.4} parent=35 // loop_header
                %s143 = sphi 0, %s147
                %p144 = scmp.ge.s32.totalorder %s143, 1
                %s148 = sphi %s137, %s137
                %s149 = sphi %s134, %s134
              $region39: #{cnn_forward.4} parent=35 // loop_header_branch
                %146 = sbr.rel (%p144) target = $region43
              $region40: #{cnn_forward.4} parent=35 // loop_body
                %v150 = vld [vmem:[%s148] sm:$0xff]
                %151 = vst [vmem:[%s149] sm:$0xff] %v150
                %v152 = vld [vmem:[%s148 + $0x8] sm:$0xff]
                %153 = vst [vmem:[%s149 + $0x8] sm:$0xff] %v152
                %v154 = vld [vmem:[%s148 + $0x310] sm:$0xff]
                %155 = vst [vmem:[%s149 + $0x10] sm:$0xff] %v154
                %v156 = vld [vmem:[%s148 + $0x318] sm:$0xff]
                %157 = vst [vmem:[%s149 + $0x18] sm:$0xff] %v156
                %v158 = vld [vmem:[%s148 + $0x620] sm:$0xff]
                %159 = vst [vmem:[%s149 + $0x20] sm:$0xff] %v158
                %v160 = vld [vmem:[%s148 + $0x628] sm:$0xff]
                %161 = vst [vmem:[%s149 + $0x28] sm:$0xff] %v160
                %v162 = vld [vmem:[%s148 + $0x930] sm:$0xff]
                %163 = vst [vmem:[%s149 + $0x30] sm:$0xff] %v162
                %v164 = vld [vmem:[%s148 + $0x938] sm:$0xff]
                %165 = vst [vmem:[%s149 + $0x38] sm:$0xff] %v164
              $region41: #{cnn_forward.4} parent=35 // loop_footer
                %s147 = sadd.s32 1, %s143
              $region42: #{cnn_forward.4} parent=35 // loop_footer_branch
                %142 = sbr.rel target = $region38
              $region43: #{cnn_forward.4} parent=35 // loop_exit
                _
            $region36: #{cnn_forward.4} parent=31 // pred_fallthru
              _
            // Predicated region
            $region44: #{cnn_forward.4} parent=31 // pred_check
              _
            $region45: #{cnn_forward.4} parent=31 // pred_check_branch
              %167 = sbr.rel target = $region47
            $region46: #{cnn_forward.4} parent=31 // pred_region
              _
            $region47: #{cnn_forward.4} parent=31 // pred_fallthru
              _
          $region32: #{cnn_forward.4} parent=27 // pred_fallthru
            _
          %168 = vnop
        $region28: #{cnn_forward.4} parent=23 // pred_fallthru
          _
      $region24: #{cnn_forward.4} parent=5 // pred_fallthru
        _
      %p169 = scmp.le.s32.totalorder 1, %s9
      %p170 = scmp.lt.s32.totalorder %s9, 50
      %p171 = pnand %p169, %p170
      %p172 = pneg %p171
      // Predicated region
      $region48: #{cnn_forward.4} parent=5 // pred_check
        _
      $region49: #{cnn_forward.4} parent=5 // pred_check_branch
        %174 = sbr.rel (%p171) target = $region51
      $region50: #{cnn_forward.4} parent=5 // pred_region
        %s175 = ssub.s32 %s9, 1
        %s176 = sand.u32 %s22, 1
        %s177 = sand.u32 %s22, 1
        %s178 = smul.addr %s177, 64
        %s179 = scalar_lea.vmem [#allocation2], %s178
        // Predicated region
        $region52: #{cnn_forward.4} parent=50 // pred_check
          %p180 = pneg %p35
        $region53: #{cnn_forward.4} parent=50 // pred_check_branch
          %182 = sbr.rel (%p180) target = $region55
        $region54: #{cnn_forward.4} parent=50 // pred_region
          _
        $region55: #{cnn_forward.4} parent=50 // pred_fallthru
          _
        %s183 = sand.u32 %s22, 1
        %s184 = sand.u32 %s22, 1
        %s185 = smul.addr %s184, 64
        %s186 = scalar_lea.vmem [#allocation2], %s185
        %p187 = pneg %p35
        %p188 = pneg %p32
        %p189 = pneg %p56
        %p190 = pneg %p53
        %p191 = pneg %p77
        %p192 = pneg %p74
        %p193 = pneg %p103
        %p194 = pneg %p100
        %s195 = sand.u32 %s90, 1
        %s196 = sand.u32 %s90, 1
        %s197 = smul.addr %s196, 64
        %s198 = scalar_lea.vmem [#allocation3], %s197
        %s199 = smul.u32 4, %s14
        %s200 = smul.u32 4, %s14
        %v202 = vld [vmem:[%s1] sm:$0xf]
        %v203 = vld [vmem:[%s1 + $0x4] sm:$0xf]
        %v204 = vld [vmem:[%s179] sm:$0xff]
        %v205 = vld [vmem:[%s179 + $0x8] sm:$0xff]
        %v206 = vld [vmem:[%s179 + $0x10] sm:$0xff]
        %v207 = vld [vmem:[%s179 + $0x18] sm:$0xff]
        %v208 = vld [vmem:[%s179 + $0x20] sm:$0xff]
        %v209 = vld [vmem:[%s179 + $0x28] sm:$0xff]
        %v210 = vld [vmem:[%s179 + $0x30] sm:$0x33]
        %v211 = vld [vmem:[%s179 + $0x38] sm:$0x33]
        %v212 = vld [vmem:[%s2] sm:$0xff]
        %v213 = vld [vmem:[%s2 + $0x8] sm:$0xff]
        %215 = vset.pattern.permute.xlu0 0
        %216 = vperm.xlu0 %215, %v212
        %v217 = vpop.permute.xlu0 %216
        %220 = vset.pattern.permute.xlu0 0
        %221 = vperm.xlu0 %220, %v213
        %v222 = vpop.permute.xlu0 %221
        %v226 = vunpack.c.l.b16 %v202
        %v227 = vunpack.c.l.b16 %v203
        %v228 = vpack.c.b16 %v227, %v226
        %v237 = vunpack.c.l.b16 %v204
        %v238 = vunpack.c.h.b16 %v204
        %v239 = vunpack.c.l.b16 %v205
        %v240 = vunpack.c.h.b16 %v205
        %v241 = vunpack.c.l.b16 %v206
        %v242 = vunpack.c.h.b16 %v206
        %v243 = vunpack.c.l.b16 %v207
        %v244 = vunpack.c.h.b16 %v207
        %v245 = vunpack.c.l.b16 %v208
        %v246 = vunpack.c.h.b16 %v208
        %v247 = vunpack.c.l.b16 %v209
        %v248 = vunpack.c.h.b16 %v209
        %v249 = vunpack.c.l.b16 %v210
        %v250 = vunpack.c.h.b16 %v210
        %v251 = vunpack.c.l.b16 %v211
        %v252 = vunpack.c.h.b16 %v211
        %v253 = vpack.c.b16 %v241, %v237
        %v254 = vpack.c.b16 %v242, %v238
        %v255 = vpack.c.b16 %v243, %v239
        %v256 = vpack.c.b16 %v244, %v240
        %v257 = vpack.c.b16 %v249, %v245
        %v258 = vpack.c.b16 %v250, %v246
        %v259 = vpack.c.b16 %v251, %v247
        %v260 = vpack.c.b16 %v252, %v248
        %vm265 = vcmask 220160
        %v267 = vsel %vm265, %v228, 0
        %vm269 = vcmask 1044480
        %vm270 = vcmask 1045504
        %v271 = vsel %vm269, 4294967295, 65535
        %v272 = vsel %vm270, %v271, 0
        %v274 = vand.u32 %v257, %v272
        %v277 = vand.u32 %v258, %v272
        %v280 = vand.u32 %v259, %v272
        %v283 = vand.u32 %v260, %v272
        %285 = vmatpush.bf16.msra.mxu0 0
        %286 = vmatpush.bf16.msra.mxu0 0
        %287 = vmatpush.bf16.msra.mxu0 0
        %288 = vmatpush.bf16.msra.mxu0 0
        %289 = vmatpush.bf16.msra.mxu0 0
        %290 = vmatpush.bf16.msra.mxu0 0
        %291 = vmatpush.bf16.msra.mxu0 %v274
        %292 = vmatpush.bf16.msra.mxu0 %v253
        %293 = vmatmul.bf16.gmra.mxu0 %v267
        %v294 = vpop.f32.mrf.mxu0
        %v295 = vadd.f32 %v217, %v294
        %v296 = vpop.f32.mrf.mxu0
        %v297 = vadd.f32 %v222, %v296
        %298 = vdwg.mxu0
        %299 = vmatpush.bf16.msra.mxu0 0
        %300 = vmatpush.bf16.msra.mxu0 0
        %301 = vmatpush.bf16.msra.mxu0 0
        %302 = vmatpush.bf16.msra.mxu0 0
        %303 = vmatpush.bf16.msra.mxu0 0
        %304 = vmatpush.bf16.msra.mxu0 0
        %305 = vmatpush.bf16.msra.mxu0 %v277
        %306 = vmatpush.bf16.msra.mxu0 %v254
        %307 = vmatmul.bf16.gmra.mxu0 %v267
        %v308 = vpop.f32.mrf.mxu0
        %v309 = vadd.f32 %v217, %v308
        %v310 = vpop.f32.mrf.mxu0
        %v311 = vadd.f32 %v222, %v310
        %312 = vdwg.mxu0
        %313 = vmatpush.bf16.msra.mxu0 0
        %314 = vmatpush.bf16.msra.mxu0 0
        %315 = vmatpush.bf16.msra.mxu0 0
        %316 = vmatpush.bf16.msra.mxu0 0
        %317 = vmatpush.bf16.msra.mxu0 0
        %318 = vmatpush.bf16.msra.mxu0 0
        %319 = vmatpush.bf16.msra.mxu0 %v280
        %320 = vmatpush.bf16.msra.mxu0 %v255
        %321 = vmatmul.bf16.gmra.mxu0 %v267
        %v322 = vpop.f32.mrf.mxu0
        %v323 = vadd.f32 %v217, %v322
        %v324 = vpop.f32.mrf.mxu0
        %v325 = vadd.f32 %v222, %v324
        %326 = vdwg.mxu0
        %327 = vmatpush.bf16.msra.mxu0 0
        %328 = vmatpush.bf16.msra.mxu0 0
        %329 = vmatpush.bf16.msra.mxu0 0
        %330 = vmatpush.bf16.msra.mxu0 0
        %331 = vmatpush.bf16.msra.mxu0 0
        %332 = vmatpush.bf16.msra.mxu0 0
        %333 = vmatpush.bf16.msra.mxu0 %v283
        %334 = vmatpush.bf16.msra.mxu0 %v256
        %335 = vmatmul.bf16.gmra.mxu0 %v267
        %v336 = vpop.f32.mrf.mxu0
        %v337 = vadd.f32 %v217, %v336
        %v338 = vpop.f32.mrf.mxu0
        %v339 = vadd.f32 %v222, %v338
        %340 = vdwg.mxu0
        %v341 = vmax.f32 %v295, 0.0
        %v342 = vmax.f32 %v309, 0.0
        %v343 = vmax.f32 %v323, 0.0
        %v344 = vmax.f32 %v337, 0.0
        %v345 = vmax.f32 %v297, 0.0
        %v346 = vmax.f32 %v311, 0.0
        %v347 = vmax.f32 %v325, 0.0
        %v348 = vmax.f32 %v339, 0.0
        %349 = vst [vmem:[%s198] sm:$0xff] %v341
        %350 = vst [vmem:[%s198 + $0x8] sm:$0xff] %v342
        %351 = vst [vmem:[%s198 + $0x10] sm:$0xff] %v343
        %352 = vst [vmem:[%s198 + $0x18] sm:$0xff] %v344
        %353 = vst [vmem:[%s198 + $0x20] sm:$0xff] %v345
        %354 = vst [vmem:[%s198 + $0x28] sm:$0xff] %v346
        %355 = vst [vmem:[%s198 + $0x30] sm:$0xff] %v347
        %356 = vst [vmem:[%s198 + $0x38] sm:$0xff] %v348
        %s357 = sand.u32 %s90, 1
        %s358 = sand.u32 %s90, 1
        %s359 = smul.addr %s358, 64
        %s360 = scalar_lea.vmem [#allocation3], %s359
        // Predicated region
        $region56: #{cnn_forward.4} parent=50 // pred_check
          %p361 = pneg %p100
        $region57: #{cnn_forward.4} parent=50 // pred_check_branch
          %363 = sbr.rel (%p361) target = $region59
        $region58: #{cnn_forward.4} parent=50 // pred_region
          %s364 = smul.u32 4, %s14
          %s365 = smul.addr %s364, 8
          %s366 = scalar_lea.vmem %s3, %s365
          // Predicated region
          $region60: #{cnn_forward.4} parent=58 // pred_check
            _
          $region61: #{cnn_forward.4} parent=58 // pred_check_branch
            %368 = sbr.rel (0) target = $region63
          $region62: #{cnn_forward.4} parent=58 // pred_region
            // Predicated region
            $region64: #{cnn_forward.4} parent=62 // pred_check
              _
            $region65: #{cnn_forward.4} parent=62 // pred_check_branch
              %370 = sbr.rel (0) target = $region67
            $region66: #{cnn_forward.4} parent=62 // pred_region
              loop: start=0, step=1, limit=1
              $region68: #{cnn_forward.4} parent=66 // loop_pre_header
                _
              $region69: #{cnn_forward.4} parent=66 // loop_header
                %s372 = sphi 0, %s376
                %p373 = scmp.ge.s32.totalorder %s372, 1
                %s377 = sphi %s360, %s360
                %s378 = sphi %s366, %s366
              $region70: #{cnn_forward.4} parent=66 // loop_header_branch
                %375 = sbr.rel (%p373) target = $region74
              $region71: #{cnn_forward.4} parent=66 // loop_body
                %v379 = vld [vmem:[%s377] sm:$0xff]
                %380 = vst [vmem:[%s378] sm:$0xff] %v379
                %v381 = vld [vmem:[%s377 + $0x8] sm:$0xff]
                %382 = vst [vmem:[%s378 + $0x8] sm:$0xff] %v381
                %v383 = vld [vmem:[%s377 + $0x10] sm:$0xff]
                %384 = vst [vmem:[%s378 + $0x10] sm:$0xff] %v383
                %v385 = vld [vmem:[%s377 + $0x18] sm:$0xff]
                %386 = vst [vmem:[%s378 + $0x18] sm:$0xff] %v385
                %v387 = vld [vmem:[%s377 + $0x20] sm:$0xff]
                %388 = vst [vmem:[%s378 + $0x620] sm:$0xff] %v387
                %v389 = vld [vmem:[%s377 + $0x28] sm:$0xff]
                %390 = vst [vmem:[%s378 + $0x628] sm:$0xff] %v389
                %v391 = vld [vmem:[%s377 + $0x30] sm:$0xff]
                %392 = vst [vmem:[%s378 + $0x630] sm:$0xff] %v391
                %v393 = vld [vmem:[%s377 + $0x38] sm:$0xff]
                %394 = vst [vmem:[%s378 + $0x638] sm:$0xff] %v393
              $region72: #{cnn_forward.4} parent=66 // loop_footer
                %s376 = sadd.s32 1, %s372
              $region73: #{cnn_forward.4} parent=66 // loop_footer_branch
                %371 = sbr.rel target = $region69
              $region74: #{cnn_forward.4} parent=66 // loop_exit
                _
            $region67: #{cnn_forward.4} parent=62 // pred_fallthru
              _
            // Predicated region
            $region75: #{cnn_forward.4} parent=62 // pred_check
              _
            $region76: #{cnn_forward.4} parent=62 // pred_check_branch
              %396 = sbr.rel target = $region78
            $region77: #{cnn_forward.4} parent=62 // pred_region
              _
            $region78: #{cnn_forward.4} parent=62 // pred_fallthru
              _
          $region63: #{cnn_forward.4} parent=58 // pred_fallthru
            _
          %397 = vnop
        $region59: #{cnn_forward.4} parent=50 // pred_fallthru
          _
      $region51: #{cnn_forward.4} parent=5 // pred_fallthru
        _
      %p398 = scmp.le.s32.totalorder 2, %s9
      // Predicated region
      $region79: #{cnn_forward.4} parent=5 // pred_check
        %p399 = pneg %p398
      $region80: #{cnn_forward.4} parent=5 // pred_check_branch
        %401 = sbr.rel (%p399) target = $region82
      $region81: #{cnn_forward.4} parent=5 // pred_region
        %s402 = ssub.s32 %s9, 2
        // Predicated region
        $region83: #{cnn_forward.4} parent=81 // pred_check
          %p403 = pneg %p106
        $region84: #{cnn_forward.4} parent=81 // pred_check_branch
          %405 = sbr.rel (%p403) target = $region86
        $region85: #{cnn_forward.4} parent=81 // pred_region
          %s406 = sand.u32 %s91, 1
          %s407 = sand.u32 %s91, 1
          %s408 = smul.addr %s407, 64
          %s409 = scalar_lea.vmem [#allocation3], %s408
        $region86: #{cnn_forward.4} parent=81 // pred_fallthru
          _
      $region82: #{cnn_forward.4} parent=5 // pred_fallthru
        _
    $region6: #{cnn_forward.4} parent=1 // loop_footer
      %s13 = sadd.s32 1, %s9
    $region7: #{cnn_forward.4} parent=1 // loop_footer_branch
      %8 = sbr.rel target = $region3
    $region8: #{cnn_forward.4} parent=1 // loop_exit
      _

// kernel: cnn_forward.5
$region0: #{cnn_forward.5}
  #allocation0 [shape = 'u32[]', space=smem, size = 0x4, offset = 0x4, fixed_abs, tag = 'smem constant byte address 0x4 - core index']
  #allocation1 [shape = 'u32[72,128]{1,0:T(1,128)}', space=vmem, size = 0x9000, scoped, tag = 'internal scratch']
  %s0 = inlined_call_operand.vmem [shape: bf16[144,1536], index: 0, kind: input, shape index: {}]
  %s1 = inlined_call_operand.vmem [shape: bf16[32,144], index: 1, kind: input, shape index: {}]
  %s2 = inlined_call_operand.vmem [shape: f32[32,1], index: 2, kind: input, shape index: {}]
  %s3 = inlined_call_operand.vmem [shape: f32[32,1536], index: 3, kind: output, shape index: {}]
  %s4 = sld [smem:[#allocation0]]
  $region87: #{cnn_forward.5} parent=0
    _
  %s6 = ssub.s32 1, %s4
  %s7 = scalar_select 0, %s6, %s4
  $region1: #{cnn_forward.5} parent=0
    #allocation2 [shape = 'u8[294912]{0}', space=vmem, size = 0x48000, scoped, tag = 'input window, operand 0']
    #allocation3 [shape = 'u8[131072]{0}', space=vmem, size = 0x20000, scoped, tag = 'output window, operand 0']
    loop: start=0, step=1, limit=5
    $region2: #{cnn_forward.5} parent=1 // loop_pre_header
      _
    $region3: #{cnn_forward.5} parent=1 // loop_header
      %s9 = sphi 0, %s13
      %p10 = scmp.ge.s32.totalorder %s9, 5
      %s19 = sphi 0, %s21
      %s22 = sphi 0, %s19
      %s23 = sphi 0, %s22
      %s39 = sphi 0, %s23
      %s43 = sphi 0, %s43
      %s45 = sphi 0, %s43
      %s46 = sphi 0, %s45
      %s60 = sphi 0, %s46
      %s64 = sphi 0, %s64
      %s66 = sphi 0, %s64
      %s67 = sphi 0, %s66
      %s81 = sphi 0, %s67
      %s87 = sphi 0, %s89
      %s90 = sphi 0, %s87
      %s91 = sphi 0, %s90
      %s107 = sphi 0, %s91
    $region4: #{cnn_forward.5} parent=1 // loop_header_branch
      %12 = sbr.rel (%p10) target = $region8
    $region5: #{cnn_forward.5} parent=1 // loop_body
      %s14 = ssub.s32 %s9, 1
      %s15 = ssub.s32 %s9, 2
      %s16 = sadd.s32 %s9, 1
      %s17 = ssub.s32 %s9, %s16
      %p18 = scmp.eq.s32.totalorder %s17, 0
      %s20 = sadd.s32 %s19, 1
      %s21 = scalar_select %p18, %s19, %s20
      %p24 = pneg %p18
      %p25 = scmp.eq.s32.totalorder %s9, 2
      %p26 = por %p24, %p25
      %p27 = scmp.ne.s32.totalorder %s19, %s22
      %p28 = scmp.eq.s32.totalorder %s9, 0
      %p29 = por %p27, %p28
      %p30 = scmp.ne.s32.totalorder %s19, %s22
      %p31 = scmp.eq.s32.totalorder %s14, 2
      %p32 = por %p30, %p31
      %p33 = scmp.ne.s32.totalorder %s22, %s23
      %p34 = scmp.eq.s32.totalorder %s14, 0
      %p35 = por %p33, %p34
      %p36 = scmp.ne.s32.totalorder %s22, %s23
      %p37 = scmp.eq.s32.totalorder %s15, 2
      %p38 = por %p36, %p37
      %p40 = scmp.ne.s32.totalorder %s23, %s39
      %p41 = scmp.eq.s32.totalorder %s15, 0
      %p42 = por %p40, %p41
      %s44 = sadd.s32 %s43, 1
      %p47 = scmp.eq.s32.totalorder %s9, 2
      %p48 = scmp.ne.s32.totalorder %s43, %s45
      %p49 = scmp.eq.s32.totalorder %s9, 0
      %p50 = por %p48, %p49
      %p51 = scmp.ne.s32.totalorder %s43, %s45
      %p52 = scmp.eq.s32.totalorder %s14, 2
      %p53 = por %p51, %p52
      %p54 = scmp.ne.s32.totalorder %s45, %s46
      %p55 = scmp.eq.s32.totalorder %s14, 0
      %p56 = por %p54, %p55
      %p57 = scmp.ne.s32.totalorder %s45, %s46
      %p58 = scmp.eq.s32.totalorder %s15, 2
      %p59 = por %p57, %p58
      %p61 = scmp.ne.s32.totalorder %s46, %s60
      %p62 = scmp.eq.s32.totalorder %s15, 0
      %p63 = por %p61, %p62
      %s65 = sadd.s32 %s64, 1
      %p68 = scmp.eq.s32.totalorder %s9, 2
      %p69 = scmp.ne.s32.totalorder %s64, %s66
      %p70 = scmp.eq.s32.totalorder %s9, 0
      %p71 = por %p69, %p70
      %p72 = scmp.ne.s32.totalorder %s64, %s66
      %p73 = scmp.eq.s32.totalorder %s14, 2
      %p74 = por %p72, %p73
      %p75 = scmp.ne.s32.totalorder %s66, %s67
      %p76 = scmp.eq.s32.totalorder %s14, 0
      %p77 = por %p75, %p76
      %p78 = scmp.ne.s32.totalorder %s66, %s67
      %p79 = scmp.eq.s32.totalorder %s15, 2
      %p80 = por %p78, %p79
      %p82 = scmp.ne.s32.totalorder %s67, %s81
      %p83 = scmp.eq.s32.totalorder %s15, 0
      %p84 = por %p82, %p83
      %s85 = ssub.s32 %s9, %s16
      %p86 = scmp.eq.s32.totalorder %s85, 0
      %s88 = sadd.s32 %s87, 1
      %s89 = scalar_select %p86, %s87, %s88
      %p92 = pneg %p86
      %p93 = scmp.eq.s32.totalorder %s9, 2
      %p94 = por %p92, %p93
      %p95 = scmp.ne.s32.totalorder %s87, %s90
      %p96 = scmp.eq.s32.totalorder %s9, 0
      %p97 = por %p95, %p96
      %p98 = scmp.ne.s32.totalorder %s87, %s90
      %p99 = scmp.eq.s32.totalorder %s14, 2
      %p100 = por %p98, %p99
      %p101 = scmp.ne.s32.totalorder %s90, %s91
      %p102 = scmp.eq.s32.totalorder %s14, 0
      %p103 = por %p101, %p102
      %p104 = scmp.ne.s32.totalorder %s90, %s91
      %p105 = scmp.eq.s32.totalorder %s15, 2
      %p106 = por %p104, %p105
      %p108 = scmp.ne.s32.totalorder %s91, %s107
      %p109 = scmp.eq.s32.totalorder %s15, 0
      %p110 = por %p108, %p109
      %p111 = scmp.le.s32.totalorder 1, %s9
      %p112 = scmp.lt.s32.totalorder %s9, 4
      %p113 = pnand %p111, %p112
      %p114 = pneg %p113
      // Predicated region
      $region9: #{cnn_forward.5} parent=5 // pred_check
        _
      $region10: #{cnn_forward.5} parent=5 // pred_check_branch
        %116 = sbr.rel (%p113) target = $region12
      $region11: #{cnn_forward.5} parent=5 // pred_region
        %s117 = ssub.s32 %s9, 1
        // Predicated region
        $region13: #{cnn_forward.5} parent=11 // pred_check
          %p118 = pneg %p56
        $region14: #{cnn_forward.5} parent=11 // pred_check_branch
          %120 = sbr.rel (%p118) target = $region16
        $region15: #{cnn_forward.5} parent=11 // pred_region
          _
        $region16: #{cnn_forward.5} parent=11 // pred_fallthru
          _
        // Predicated region
        $region17: #{cnn_forward.5} parent=11 // pred_check
          %p121 = pneg %p77
        $region18: #{cnn_forward.5} parent=11 // pred_check_branch
          %123 = sbr.rel (%p121) target = $region20
        $region19: #{cnn_forward.5} parent=11 // pred_region
          _
        $region20: #{cnn_forward.5} parent=11 // pred_fallthru
          _
      $region12: #{cnn_forward.5} parent=5 // pred_fallthru
        _
      %p124 = scmp.lt.s32.totalorder %s9, 3
      // Predicated region
      $region21: #{cnn_forward.5} parent=5 // pred_check
        %p125 = pneg %p124
      $region22: #{cnn_forward.5} parent=5 // pred_check_branch
        %127 = sbr.rel (%p125) target = $region24
      $region23: #{cnn_forward.5} parent=5 // pred_region
        // Predicated region
        $region25: #{cnn_forward.5} parent=23 // pred_check
          %p128 = pneg %p29
        $region26: #{cnn_forward.5} parent=23 // pred_check_branch
          %130 = sbr.rel (%p128) target = $region28
        $region27: #{cnn_forward.5} parent=23 // pred_region
          %s131 = sand.u32 %s19, 1
          %s132 = sand.u32 %s19, 1
          %s133 = smul.addr %s132, 288
          %s134 = scalar_lea.vmem [#allocation2], %s133
          %s135 = smul.u32 4, %s9
          %s136 = smul.addr %s135, 4
          %s137 = scalar_lea.vmem %s0, %s136
          // Predicated region
          $region29: #{cnn_forward.5} parent=27 // pred_check
            _
          $region30: #{cnn_forward.5} parent=27 // pred_check_branch
            %139 = sbr.rel (0) target = $region32
          $region31: #{cnn_forward.5} parent=27 // pred_region
            // Predicated region
            $region33: #{cnn_forward.5} parent=31 // pred_check
              _
            $region34: #{cnn_forward.5} parent=31 // pred_check_branch
              %141 = sbr.rel (0) target = $region36
            $region35: #{cnn_forward.5} parent=31 // pred_region
              loop: start=0, step=1, limit=1
              $region37: #{cnn_forward.5} parent=35 // loop_pre_header
                _
              $region38: #{cnn_forward.5} parent=35 // loop_header
                %s143 = sphi 0, %s147
                %p144 = scmp.ge.s32.totalorder %s143, 1
                %s148 = sphi %s137, %s137
                %s149 = sphi %s134, %s134
              $region39: #{cnn_forward.5} parent=35 // loop_header_branch
                %146 = sbr.rel (%p144) target = $region43
              $region40: #{cnn_forward.5} parent=35 // loop_body
                %v150 = vld [vmem:[%s148] sm:$0xff]
                %151 = vst [vmem:[%s149] sm:$0xff] %v150
                %v152 = vld [vmem:[%s148 + $0x8] sm:$0xff]
                %153 = vst [vmem:[%s149 + $0x8] sm:$0xff] %v152
                %v154 = vld [vmem:[%s148 + $0x30] sm:$0xff]
                %155 = vst [vmem:[%s149 + $0x10] sm:$0xff] %v154
                %v156 = vld [vmem:[%s148 + $0x38] sm:$0xff]
                %157 = vst [vmem:[%s149 + $0x18] sm:$0xff] %v156
                %v158 = vld [vmem:[%s148 + $0x60] sm:$0xff]
                %159 = vst [vmem:[%s149 + $0x20] sm:$0xff] %v158
                %v160 = vld [vmem:[%s148 + $0x68] sm:$0xff]
                %161 = vst [vmem:[%s149 + $0x28] sm:$0xff] %v160
                %v162 = vld [vmem:[%s148 + $0x90] sm:$0xff]
                %163 = vst [vmem:[%s149 + $0x30] sm:$0xff] %v162
                %v164 = vld [vmem:[%s148 + $0x98] sm:$0xff]
                %165 = vst [vmem:[%s149 + $0x38] sm:$0xff] %v164
                %v166 = vld [vmem:[%s148 + $0xc0] sm:$0xff]
                %167 = vst [vmem:[%s149 + $0x40] sm:$0xff] %v166
                %v168 = vld [vmem:[%s148 + $0xc8] sm:$0xff]
                %169 = vst [vmem:[%s149 + $0x48] sm:$0xff] %v168
                %v170 = vld [vmem:[%s148 + $0xf0] sm:$0xff]
                %171 = vst [vmem:[%s149 + $0x50] sm:$0xff] %v170
                %v172 = vld [vmem:[%s148 + $0xf8] sm:$0xff]
                %173 = vst [vmem:[%s149 + $0x58] sm:$0xff] %v172
                %v174 = vld [vmem:[%s148 + $0x120] sm:$0xff]
                %175 = vst [vmem:[%s149 + $0x60] sm:$0xff] %v174
                %v176 = vld [vmem:[%s148 + $0x128] sm:$0xff]
                %177 = vst [vmem:[%s149 + $0x68] sm:$0xff] %v176
                %v178 = vld [vmem:[%s148 + $0x150] sm:$0xff]
                %179 = vst [vmem:[%s149 + $0x70] sm:$0xff] %v178
                %v180 = vld [vmem:[%s148 + $0x158] sm:$0xff]
                %181 = vst [vmem:[%s149 + $0x78] sm:$0xff] %v180
                %v182 = vld [vmem:[%s148 + $0x180] sm:$0xff]
                %183 = vst [vmem:[%s149 + $0x80] sm:$0xff] %v182
                %v184 = vld [vmem:[%s148 + $0x188] sm:$0xff]
                %185 = vst [vmem:[%s149 + $0x88] sm:$0xff] %v184
                %v186 = vld [vmem:[%s148 + $0x1b0] sm:$0xff]
                %187 = vst [vmem:[%s149 + $0x90] sm:$0xff] %v186
                %v188 = vld [vmem:[%s148 + $0x1b8] sm:$0xff]
                %189 = vst [vmem:[%s149 + $0x98] sm:$0xff] %v188
                %v190 = vld [vmem:[%s148 + $0x1e0] sm:$0xff]
                %191 = vst [vmem:[%s149 + $0xa0] sm:$0xff] %v190
                %v192 = vld [vmem:[%s148 + $0x1e8] sm:$0xff]
                %193 = vst [vmem:[%s149 + $0xa8] sm:$0xff] %v192
                %v194 = vld [vmem:[%s148 + $0x210] sm:$0xff]
                %195 = vst [vmem:[%s149 + $0xb0] sm:$0xff] %v194
                %v196 = vld [vmem:[%s148 + $0x218] sm:$0xff]
                %197 = vst [vmem:[%s149 + $0xb8] sm:$0xff] %v196
                %v198 = vld [vmem:[%s148 + $0x240] sm:$0xff]
                %199 = vst [vmem:[%s149 + $0xc0] sm:$0xff] %v198
                %v200 = vld [vmem:[%s148 + $0x248] sm:$0xff]
                %201 = vst [vmem:[%s149 + $0xc8] sm:$0xff] %v200
                %v202 = vld [vmem:[%s148 + $0x270] sm:$0xff]
                %203 = vst [vmem:[%s149 + $0xd0] sm:$0xff] %v202
                %v204 = vld [vmem:[%s148 + $0x278] sm:$0xff]
                %205 = vst [vmem:[%s149 + $0xd8] sm:$0xff] %v204
                %v206 = vld [vmem:[%s148 + $0x2a0] sm:$0xff]
                %207 = vst [vmem:[%s149 + $0xe0] sm:$0xff] %v206
                %v208 = vld [vmem:[%s148 + $0x2a8] sm:$0xff]
                %209 = vst [vmem:[%s149 + $0xe8] sm:$0xff] %v208
                %v210 = vld [vmem:[%s148 + $0x2d0] sm:$0xff]
                %211 = vst [vmem:[%s149 + $0xf0] sm:$0xff] %v210
                %v212 = vld [vmem:[%s148 + $0x2d8] sm:$0xff]
                %213 = vst [vmem:[%s149 + $0xf8] sm:$0xff] %v212
                %v214 = vld [vmem:[%s148 + $0x300] sm:$0xff]
                %215 = vst [vmem:[%s149 + $0x100] sm:$0xff] %v214
                %v216 = vld [vmem:[%s148 + $0x308] sm:$0xff]
                %217 = vst [vmem:[%s149 + $0x108] sm:$0xff] %v216
                %v218 = vld [vmem:[%s148 + $0x330] sm:$0xff]
                %219 = vst [vmem:[%s149 + $0x110] sm:$0xff] %v218
                %v220 = vld [vmem:[%s148 + $0x338] sm:$0xff]
                %221 = vst [vmem:[%s149 + $0x118] sm:$0xff] %v220
              $region41: #{cnn_forward.5} parent=35 // loop_footer
                %s147 = sadd.s32 1, %s143
              $region42: #{cnn_forward.5} parent=35 // loop_footer_branch
                %142 = sbr.rel target = $region38
              $region43: #{cnn_forward.5} parent=35 // loop_exit
                _
            $region36: #{cnn_forward.5} parent=31 // pred_fallthru
              _
            // Predicated region
            $region44: #{cnn_forward.5} parent=31 // pred_check
              _
            $region45: #{cnn_forward.5} parent=31 // pred_check_branch
              %223 = sbr.rel target = $region47
            $region46: #{cnn_forward.5} parent=31 // pred_region
              _
            $region47: #{cnn_forward.5} parent=31 // pred_fallthru
              _
          $region32: #{cnn_forward.5} parent=27 // pred_fallthru
            _
          %224 = vnop
        $region28: #{cnn_forward.5} parent=23 // pred_fallthru
          _
      $region24: #{cnn_forward.5} parent=5 // pred_fallthru
        _
      %p225 = scmp.le.s32.totalorder 1, %s9
      %p226 = scmp.lt.s32.totalorder %s9, 4
      %p227 = pnand %p225, %p226
      %p228 = pneg %p227
      // Predicated region
      $region48: #{cnn_forward.5} parent=5 // pred_check
        _
      $region49: #{cnn_forward.5} parent=5 // pred_check_branch
        %230 = sbr.rel (%p227) target = $region51
      $region50: #{cnn_forward.5} parent=5 // pred_region
        %s231 = ssub.s32 %s9, 1
        %s232 = sand.u32 %s22, 1
        %s233 = sand.u32 %s22, 1
        %s234 = smul.addr %s233, 288
        %s235 = scalar_lea.vmem [#allocation2], %s234
        // Predicated region
        $region52: #{cnn_forward.5} parent=50 // pred_check
          %p236 = pneg %p35
        $region53: #{cnn_forward.5} parent=50 // pred_check_branch
          %238 = sbr.rel (%p236) target = $region55
        $region54: #{cnn_forward.5} parent=50 // pred_region
          _
        $region55: #{cnn_forward.5} parent=50 // pred_fallthru
          _
        %s239 = sand.u32 %s22, 1
        %s240 = sand.u32 %s22, 1
        %s241 = smul.addr %s240, 288
        %s242 = scalar_lea.vmem [#allocation2], %s241
        %p243 = pneg %p35
        %p244 = pneg %p32
        %p245 = pneg %p56
        %p246 = pneg %p53
        %p247 = pneg %p77
        %p248 = pneg %p74
        %p249 = pneg %p103
        %p250 = pneg %p100
        %s251 = sand.u32 %s90, 1
        %s252 = sand.u32 %s90, 1
        %s253 = smul.addr %s252, 128
        %s254 = scalar_lea.vmem [#allocation3], %s253
        %s255 = smul.u32 4, %s14
        %s256 = smul.u32 4, %s14
        %v258 = vld [vmem:[%s1] sm:$0xff]
        %v259 = vld [vmem:[%s1 + $0x8] sm:$0xff]
        %v260 = vld [vmem:[%s1 + $0x10] sm:$0xff]
        %v261 = vld [vmem:[%s1 + $0x18] sm:$0xff]
        %v262 = vld [vmem:[%s235] sm:$0xff]
        %v263 = vld [vmem:[%s235 + $0x8] sm:$0xff]
        %v264 = vld [vmem:[%s235 + $0x10] sm:$0xff]
        %v265 = vld [vmem:[%s235 + $0x18] sm:$0xff]
        %v266 = vld [vmem:[%s235 + $0x20] sm:$0xff]
        %v267 = vld [vmem:[%s235 + $0x28] sm:$0xff]
        %v268 = vld [vmem:[%s235 + $0x30] sm:$0xff]
        %v269 = vld [vmem:[%s235 + $0x38] sm:$0xff]
        %v270 = vld [vmem:[%s235 + $0x40] sm:$0xff]
        %v271 = vld [vmem:[%s235 + $0x48] sm:$0xff]
        %v272 = vld [vmem:[%s235 + $0x50] sm:$0xff]
        %v273 = vld [vmem:[%s235 + $0x58] sm:$0xff]
        %v274 = vld [vmem:[%s235 + $0x60] sm:$0xff]
        %v275 = vld [vmem:[%s235 + $0x68] sm:$0xff]
        %v276 = vld [vmem:[%s235 + $0x70] sm:$0xff]
        %v277 = vld [vmem:[%s235 + $0x78] sm:$0xff]
        %v278 = vld [vmem:[%s235 + $0x80] sm:$0xff]
        %v279 = vld [vmem:[%s235 + $0x88] sm:$0xff]
        %v280 = vld [vmem:[%s235 + $0x90] sm:$0xff]
        %v281 = vld [vmem:[%s235 + $0x98] sm:$0xff]
        %v282 = vld [vmem:[%s235 + $0xa0] sm:$0xff]
        %v283 = vld [vmem:[%s235 + $0xa8] sm:$0xff]
        %v284 = vld [vmem:[%s235 + $0xb0] sm:$0xff]
        %v285 = vld [vmem:[%s235 + $0xb8] sm:$0xff]
        %v286 = vld [vmem:[%s235 + $0xc0] sm:$0xff]
        %v287 = vld [vmem:[%s235 + $0xc8] sm:$0xff]
        %v288 = vld [vmem:[%s235 + $0xd0] sm:$0xff]
        %v289 = vld [vmem:[%s235 + $0xd8] sm:$0xff]
        %v290 = vld [vmem:[%s235 + $0xe0] sm:$0xff]
        %v291 = vld [vmem:[%s235 + $0xe8] sm:$0xff]
        %v292 = vld [vmem:[%s235 + $0xf0] sm:$0xff]
        %v293 = vld [vmem:[%s235 + $0xf8] sm:$0xff]
        %v294 = vld [vmem:[%s235 + $0x100] sm:$0xff]
        %v295 = vld [vmem:[%s235 + $0x108] sm:$0xff]
        %v296 = vld [vmem:[%s235 + $0x110] sm:$0xff]
        %v297 = vld [vmem:[%s235 + $0x118] sm:$0xff]
        %v298 = vld [vmem:[%s2] sm:$0xff]
        %v299 = vld [vmem:[%s2 + $0x8] sm:$0xff]
        %v300 = vld [vmem:[%s2 + $0x10] sm:$0xff]
        %v301 = vld [vmem:[%s2 + $0x18] sm:$0xff]
        %303 = vset.pattern.permute.xlu0 0
        %304 = vperm.xlu0 %303, %v298
        %v305 = vpop.permute.xlu0 %304
        %308 = vset.pattern.permute.xlu0 0
        %309 = vperm.xlu0 %308, %v299
        %v310 = vpop.permute.xlu0 %309
        %313 = vset.pattern.permute.xlu0 0
        %314 = vperm.xlu0 %313, %v300
        %v315 = vpop.permute.xlu0 %314
        %318 = vset.pattern.permute.xlu0 0
        %319 = vperm.xlu0 %318, %v301
        %v320 = vpop.permute.xlu0 %319
        %v326 = vunpack.c.l.b16 %v258
        %v327 = vunpack.c.h.b16 %v258
        %v328 = vunpack.c.l.b16 %v259
        %v329 = vunpack.c.h.b16 %v259
        %v330 = vunpack.c.l.b16 %v260
        %v331 = vunpack.c.h.b16 %v260
        %v332 = vunpack.c.l.b16 %v261
        %v333 = vunpack.c.h.b16 %v261
        %v334 = vpack.c.b16 %v328, %v326
        %v335 = vpack.c.b16 %v329, %v327
        %v336 = vpack.c.b16 %v332, %v330
        %v337 = vpack.c.b16 %v333, %v331
        %v376 = vunpack.c.l.b16 %v262
        %v377 = vunpack.c.h.b16 %v262
        %v378 = vunpack.c.l.b16 %v263
        %v379 = vunpack.c.h.b16 %v263
        %v380 = vunpack.c.l.b16 %v264
        %v381 = vunpack.c.h.b16 %v264
        %v382 = vunpack.c.l.b16 %v265
        %v383 = vunpack.c.h.b16 %v265
        %v384 = vunpack.c.l.b16 %v266
        %v385 = vunpack.c.h.b16 %v266
        %v386 = vunpack.c.l.b16 %v267
        %v387 = vunpack.c.h.b16 %v267
        %v388 = vunpack.c.l.b16 %v268
        %v389 = vunpack.c.h.b16 %v268
        %v390 = vunpack.c.l.b16 %v269
        %v391 = vunpack.c.h.b16 %v269
        %v392 = vunpack.c.l.b16 %v270
        %v393 = vunpack.c.h.b16 %v270
        %v394 = vunpack.c.l.b16 %v271
        %v395 = vunpack.c.h.b16 %v271
        %v396 = vunpack.c.l.b16 %v272
        %v397 = vunpack.c.h.b16 %v272
        %v398 = vunpack.c.l.b16 %v273
        %v399 = vunpack.c.h.b16 %v273
        %v400 = vunpack.c.l.b16 %v274
        %v401 = vunpack.c.h.b16 %v274
        %v402 = vunpack.c.l.b16 %v275
        %v403 = vunpack.c.h.b16 %v275
        %v404 = vunpack.c.l.b16 %v276
        %v405 = vunpack.c.h.b16 %v276
        %v406 = vunpack.c.l.b16 %v277
        %v407 = vunpack.c.h.b16 %v277
        %v408 = vunpack.c.l.b16 %v278
        %v409 = vunpack.c.h.b16 %v278
        %v410 = vunpack.c.l.b16 %v279
        %v411 = vunpack.c.h.b16 %v279
        %v412 = vunpack.c.l.b16 %v280
        %v413 = vunpack.c.h.b16 %v280
        %v414 = vunpack.c.l.b16 %v281
        %v415 = vunpack.c.h.b16 %v281
        %v416 = vunpack.c.l.b16 %v282
        %v417 = vunpack.c.h.b16 %v282
        %v418 = vunpack.c.l.b16 %v283
        %v419 = vunpack.c.h.b16 %v283
        %v420 = vunpack.c.l.b16 %v284
        %v421 = vunpack.c.h.b16 %v284
        %v422 = vunpack.c.l.b16 %v285
        %v423 = vunpack.c.h.b16 %v285
        %v424 = vunpack.c.l.b16 %v286
        %v425 = vunpack.c.h.b16 %v286
        %v426 = vunpack.c.l.b16 %v287
        %v427 = vunpack.c.h.b16 %v287
        %v428 = vunpack.c.l.b16 %v288
        %v429 = vunpack.c.h.b16 %v288
        %v430 = vunpack.c.l.b16 %v289
        %v431 = vunpack.c.h.b16 %v289
        %v432 = vunpack.c.l.b16 %v290
        %v433 = vunpack.c.h.b16 %v290
        %v434 = vunpack.c.l.b16 %v291
        %v435 = vunpack.c.h.b16 %v291
        %v436 = vunpack.c.l.b16 %v292
        %v437 = vunpack.c.h.b16 %v292
        %v438 = vunpack.c.l.b16 %v293
        %v439 = vunpack.c.h.b16 %v293
        %v440 = vunpack.c.l.b16 %v294
        %v441 = vunpack.c.h.b16 %v294
        %v442 = vunpack.c.l.b16 %v295
        %v443 = vunpack.c.h.b16 %v295
        %v444 = vunpack.c.l.b16 %v296
        %v445 = vunpack.c.h.b16 %v296
        %v446 = vunpack.c.l.b16 %v297
        %v447 = vunpack.c.h.b16 %v297
        %v448 = vpack.c.b16 %v380, %v376
        %v449 = vpack.c.b16 %v381, %v377
        %v450 = vpack.c.b16 %v382, %v378
        %v451 = vpack.c.b16 %v383, %v379
        %v452 = vpack.c.b16 %v388, %v384
        %v453 = vpack.c.b16 %v389, %v385
        %v454 = vpack.c.b16 %v390, %v386
        %v455 = vpack.c.b16 %v391, %v387
        %v456 = vpack.c.b16 %v396, %v392
        %v457 = vpack.c.b16 %v397, %v393
        %v458 = vpack.c.b16 %v398, %v394
        %v459 = vpack.c.b16 %v399, %v395
        %v460 = vpack.c.b16 %v404, %v400
        %v461 = vpack.c.b16 %v405, %v401
        %v462 = vpack.c.b16 %v406, %v402
        %v463 = vpack.c.b16 %v407, %v403
        %v464 = vpack.c.b16 %v412, %v408
        %v465 = vpack.c.b16 %v413, %v409
        %v466 = vpack.c.b16 %v414, %v410
        %v467 = vpack.c.b16 %v415, %v411
        %v468 = vpack.c.b16 %v420, %v416
        %v469 = vpack.c.b16 %v421, %v417
        %v470 = vpack.c.b16 %v422, %v418
        %v471 = vpack.c.b16 %v423, %v419
        %v472 = vpack.c.b16 %v428, %v424
        %v473 = vpack.c.b16 %v429, %v425
        %v474 = vpack.c.b16 %v430, %v426
        %v475 = vpack.c.b16 %v431, %v427
        %v476 = vpack.c.b16 %v436, %v432
        %v477 = vpack.c.b16 %v437, %v433
        %v478 = vpack.c.b16 %v438, %v434
        %v479 = vpack.c.b16 %v439, %v435
        %v480 = vpack.c.b16 %v444, %v440
        %v481 = vpack.c.b16 %v445, %v441
        %v482 = vpack.c.b16 %v446, %v442
        %v483 = vpack.c.b16 %v447, %v443
        %vm520 = vcmask 130048
        %v522 = vsel %vm520, %v335, 0
        %v525 = vsel %vm520, %v337, 0
        %527 = vmatpush.bf16.msra.mxu0 %v476
        %528 = vmatpush.bf16.msra.mxu0 %v472
        %529 = vmatpush.bf16.msra.mxu0 %v468
        %530 = vmatpush.bf16.msra.mxu0 %v464
        %531 = vmatpush.bf16.msra.mxu0 %v460
        %532 = vmatpush.bf16.msra.mxu0 %v456
        %533 = vmatpush.bf16.msra.mxu0 %v452
        %534 = vmatpush.bf16.msra.mxu0 %v448
        %535 = vmatmul.bf16.gmra.mxu0 %v334
        %v536 = vpop.f32.mrf.mxu0
        %v537 = vadd.f32 %v305, %v536
        %v538 = vpop.f32.mrf.mxu0
        %v539 = vadd.f32 %v310, %v538
        %540 = vmatmul.bf16.gmra.mxu0 %v336
        %v541 = vpop.f32.mrf.mxu0
        %v542 = vadd.f32 %v315, %v541
        %v543 = vpop.f32.mrf.mxu0
        %v544 = vadd.f32 %v320, %v543
        %545 = vdwg.mxu0
        %546 = vmatpush.bf16.msra.mxu0 0
        %547 = vmatpush.bf16.msra.mxu0 0
        %548 = vmatpush.bf16.msra.mxu0 0
        %549 = vmatpush.bf16.msra.mxu0 0
        %550 = vmatpush.bf16.msra.mxu0 0
        %551 = vmatpush.bf16.msra.mxu0 0
        %552 = vmatpush.bf16.msra.mxu0 0
        %553 = vmatpush.bf16.msra.mxu0 %v480
        %554 = vmatmul.bf16.gmra.mxu0 %v522
        %v555 = vpop.f32.mrf.mxu0
        %v556 = vadd.f32 %v537, %v555
        %v557 = vpop.f32.mrf.mxu0
        %v558 = vadd.f32 %v539, %v557
        %559 = vmatmul.bf16.gmra.mxu0 %v525
        %v560 = vpop.f32.mrf.mxu0
        %v561 = vadd.f32 %v542, %v560
        %v562 = vpop.f32.mrf.mxu0
        %v563 = vadd.f32 %v544, %v562
        %564 = vdwg.mxu0
        %565 = vmatpush.bf16.msra.mxu0 %v477
        %566 = vmatpush.bf16.msra.mxu0 %v473
        %567 = vmatpush.bf16.msra.mxu0 %v469
        %568 = vmatpush.bf16.msra.mxu0 %v465
        %569 = vmatpush.bf16.msra.mxu0 %v461
        %570 = vmatpush.bf16.msra.mxu0 %v457
        %571 = vmatpush.bf16.msra.mxu0 %v453
        %572 = vmatpush.bf16.msra.mxu0 %v449
        %573 = vmatmul.bf16.gmra.mxu0 %v334
        %v574 = vpop.f32.mrf.mxu0
        %v575 = vadd.f32 %v305, %v574
        %v576 = vpop.f32.mrf.mxu0
        %v577 = vadd.f32 %v310, %v576
        %578 = vmatmul.bf16.gmra.mxu0 %v336
        %v579 = vpop.f32.mrf.mxu0
        %v580 = vadd.f32 %v315, %v579
        %v581 = vpop.f32.mrf.mxu0
        %v582 = vadd.f32 %v320, %v581
        %583 = vdwg.mxu0
        %584 = vmatpush.bf16.msra.mxu0 0
        %585 = vmatpush.bf16.msra.mxu0 0
        %586 = vmatpush.bf16.msra.mxu0 0
        %587 = vmatpush.bf16.msra.mxu0 0
        %588 = vmatpush.bf16.msra.mxu0 0
        %589 = vmatpush.bf16.msra.mxu0 0
        %590 = vmatpush.bf16.msra.mxu0 0
        %591 = vmatpush.bf16.msra.mxu0 %v481
        %592 = vmatmul.bf16.gmra.mxu0 %v522
        %v593 = vpop.f32.mrf.mxu0
        %v594 = vadd.f32 %v575, %v593
        %v595 = vpop.f32.mrf.mxu0
        %v596 = vadd.f32 %v577, %v595
        %597 = vmatmul.bf16.gmra.mxu0 %v525
        %v598 = vpop.f32.mrf.mxu0
        %v599 = vadd.f32 %v580, %v598
        %v600 = vpop.f32.mrf.mxu0
        %v601 = vadd.f32 %v582, %v600
        %602 = vdwg.mxu0
        %603 = vmatpush.bf16.msra.mxu0 %v478
        %604 = vmatpush.bf16.msra.mxu0 %v474
        %605 = vmatpush.bf16.msra.mxu0 %v470
        %606 = vmatpush.bf16.msra.mxu0 %v466
        %607 = vmatpush.bf16.msra.mxu0 %v462
        %608 = vmatpush.bf16.msra.mxu0 %v458
        %609 = vmatpush.bf16.msra.mxu0 %v454
        %610 = vmatpush.bf16.msra.mxu0 %v450
        %611 = vmatmul.bf16.gmra.mxu0 %v334
        %v612 = vpop.f32.mrf.mxu0
        %v613 = vadd.f32 %v305, %v612
        %v614 = vpop.f32.mrf.mxu0
        %v615 = vadd.f32 %v310, %v614
        %616 = vmatmul.bf16.gmra.mxu0 %v336
        %v617 = vpop.f32.mrf.mxu0
        %v618 = vadd.f32 %v315, %v617
        %v619 = vpop.f32.mrf.mxu0
        %v620 = vadd.f32 %v320, %v619
        %621 = vdwg.mxu0
        %622 = vmatpush.bf16.msra.mxu0 0
        %623 = vmatpush.bf16.msra.mxu0 0
        %624 = vmatpush.bf16.msra.mxu0 0
        %625 = vmatpush.bf16.msra.mxu0 0
        %626 = vmatpush.bf16.msra.mxu0 0
        %627 = vmatpush.bf16.msra.mxu0 0
        %628 = vmatpush.bf16.msra.mxu0 0
        %629 = vmatpush.bf16.msra.mxu0 %v482
        %630 = vmatmul.bf16.gmra.mxu0 %v522
        %v631 = vpop.f32.mrf.mxu0
        %v632 = vadd.f32 %v613, %v631
        %v633 = vpop.f32.mrf.mxu0
        %v634 = vadd.f32 %v615, %v633
        %635 = vmatmul.bf16.gmra.mxu0 %v525
        %v636 = vpop.f32.mrf.mxu0
        %v637 = vadd.f32 %v618, %v636
        %v638 = vpop.f32.mrf.mxu0
        %v639 = vadd.f32 %v620, %v638
        %640 = vdwg.mxu0
        %641 = vmatpush.bf16.msra.mxu0 %v479
        %642 = vmatpush.bf16.msra.mxu0 %v475
        %643 = vmatpush.bf16.msra.mxu0 %v471
        %644 = vmatpush.bf16.msra.mxu0 %v467
        %645 = vmatpush.bf16.msra.mxu0 %v463
        %646 = vmatpush.bf16.msra.mxu0 %v459
        %647 = vmatpush.bf16.msra.mxu0 %v455
        %648 = vmatpush.bf16.msra.mxu0 %v451
        %649 = vmatmul.bf16.gmra.mxu0 %v334
        %v650 = vpop.f32.mrf.mxu0
        %v651 = vadd.f32 %v305, %v650
        %v652 = vpop.f32.mrf.mxu0
        %v653 = vadd.f32 %v310, %v652
        %654 = vmatmul.bf16.gmra.mxu0 %v336
        %v655 = vpop.f32.mrf.mxu0
        %v656 = vadd.f32 %v315, %v655
        %v657 = vpop.f32.mrf.mxu0
        %v658 = vadd.f32 %v320, %v657
        %659 = vdwg.mxu0
        %660 = vmatpush.bf16.msra.mxu0 0
        %661 = vmatpush.bf16.msra.mxu0 0
        %662 = vmatpush.bf16.msra.mxu0 0
        %663 = vmatpush.bf16.msra.mxu0 0
        %664 = vmatpush.bf16.msra.mxu0 0
        %665 = vmatpush.bf16.msra.mxu0 0
        %666 = vmatpush.bf16.msra.mxu0 0
        %667 = vmatpush.bf16.msra.mxu0 %v483
        %668 = vmatmul.bf16.gmra.mxu0 %v522
        %v669 = vpop.f32.mrf.mxu0
        %v670 = vadd.f32 %v651, %v669
        %v671 = vpop.f32.mrf.mxu0
        %v672 = vadd.f32 %v653, %v671
        %673 = vmatmul.bf16.gmra.mxu0 %v525
        %v674 = vpop.f32.mrf.mxu0
        %v675 = vadd.f32 %v656, %v674
        %v676 = vpop.f32.mrf.mxu0
        %v677 = vadd.f32 %v658, %v676
        %678 = vdwg.mxu0
        %v679 = vmax.f32 %v556, 0.0
        %v680 = vmax.f32 %v594, 0.0
        %v681 = vmax.f32 %v632, 0.0
        %v682 = vmax.f32 %v670, 0.0
        %v683 = vmax.f32 %v558, 0.0
        %v684 = vmax.f32 %v596, 0.0
        %v685 = vmax.f32 %v634, 0.0
        %v686 = vmax.f32 %v672, 0.0
        %v687 = vmax.f32 %v561, 0.0
        %v688 = vmax.f32 %v599, 0.0
        %v689 = vmax.f32 %v637, 0.0
        %v690 = vmax.f32 %v675, 0.0
        %v691 = vmax.f32 %v563, 0.0
        %v692 = vmax.f32 %v601, 0.0
        %v693 = vmax.f32 %v639, 0.0
        %v694 = vmax.f32 %v677, 0.0
        %695 = vst [vmem:[%s254] sm:$0xff] %v679
        %696 = vst [vmem:[%s254 + $0x8] sm:$0xff] %v680
        %697 = vst [vmem:[%s254 + $0x10] sm:$0xff] %v681
        %698 = vst [vmem:[%s254 + $0x18] sm:$0xff] %v682
        %699 = vst [vmem:[%s254 + $0x20] sm:$0xff] %v683
        %700 = vst [vmem:[%s254 + $0x28] sm:$0xff] %v684
        %701 = vst [vmem:[%s254 + $0x30] sm:$0xff] %v685
        %702 = vst [vmem:[%s254 + $0x38] sm:$0xff] %v686
        %703 = vst [vmem:[%s254 + $0x40] sm:$0xff] %v687
        %704 = vst [vmem:[%s254 + $0x48] sm:$0xff] %v688
        %705 = vst [vmem:[%s254 + $0x50] sm:$0xff] %v689
        %706 = vst [vmem:[%s254 + $0x58] sm:$0xff] %v690
        %707 = vst [vmem:[%s254 + $0x60] sm:$0xff] %v691
        %708 = vst [vmem:[%s254 + $0x68] sm:$0xff] %v692
        %709 = vst [vmem:[%s254 + $0x70] sm:$0xff] %v693
        %710 = vst [vmem:[%s254 + $0x78] sm:$0xff] %v694
        %s711 = sand.u32 %s90, 1
        %s712 = sand.u32 %s90, 1
        %s713 = smul.addr %s712, 128
        %s714 = scalar_lea.vmem [#allocation3], %s713
        // Predicated region
        $region56: #{cnn_forward.5} parent=50 // pred_check
          %p715 = pneg %p100
        $region57: #{cnn_forward.5} parent=50 // pred_check_branch
          %717 = sbr.rel (%p715) target = $region59
        $region58: #{cnn_forward.5} parent=50 // pred_region
          %s718 = smul.u32 4, %s14
          %s719 = smul.addr %s718, 8
          %s720 = scalar_lea.vmem %s3, %s719
          // Predicated region
          $region60: #{cnn_forward.5} parent=58 // pred_check
            _
          $region61: #{cnn_forward.5} parent=58 // pred_check_branch
            %722 = sbr.rel (0) target = $region63
          $region62: #{cnn_forward.5} parent=58 // pred_region
            // Predicated region
            $region64: #{cnn_forward.5} parent=62 // pred_check
              _
            $region65: #{cnn_forward.5} parent=62 // pred_check_branch
              %724 = sbr.rel (0) target = $region67
            $region66: #{cnn_forward.5} parent=62 // pred_region
              loop: start=0, step=1, limit=1
              $region68: #{cnn_forward.5} parent=66 // loop_pre_header
                _
              $region69: #{cnn_forward.5} parent=66 // loop_header
                %s726 = sphi 0, %s730
                %p727 = scmp.ge.s32.totalorder %s726, 1
                %s731 = sphi %s714, %s714
                %s732 = sphi %s720, %s720
              $region70: #{cnn_forward.5} parent=66 // loop_header_branch
                %729 = sbr.rel (%p727) target = $region74
              $region71: #{cnn_forward.5} parent=66 // loop_body
                %v733 = vld [vmem:[%s731] sm:$0xff]
                %734 = vst [vmem:[%s732] sm:$0xff] %v733
                %v735 = vld [vmem:[%s731 + $0x8] sm:$0xff]
                %736 = vst [vmem:[%s732 + $0x8] sm:$0xff] %v735
                %v737 = vld [vmem:[%s731 + $0x10] sm:$0xff]
                %738 = vst [vmem:[%s732 + $0x10] sm:$0xff] %v737
                %v739 = vld [vmem:[%s731 + $0x18] sm:$0xff]
                %740 = vst [vmem:[%s732 + $0x18] sm:$0xff] %v739
                %v741 = vld [vmem:[%s731 + $0x20] sm:$0xff]
                %742 = vst [vmem:[%s732 + $0x60] sm:$0xff] %v741
                %v743 = vld [vmem:[%s731 + $0x28] sm:$0xff]
                %744 = vst [vmem:[%s732 + $0x68] sm:$0xff] %v743
                %v745 = vld [vmem:[%s731 + $0x30] sm:$0xff]
                %746 = vst [vmem:[%s732 + $0x70] sm:$0xff] %v745
                %v747 = vld [vmem:[%s731 + $0x38] sm:$0xff]
                %748 = vst [vmem:[%s732 + $0x78] sm:$0xff] %v747
                %v749 = vld [vmem:[%s731 + $0x40] sm:$0xff]
                %750 = vst [vmem:[%s732 + $0xc0] sm:$0xff] %v749
                %v751 = vld [vmem:[%s731 + $0x48] sm:$0xff]
                %752 = vst [vmem:[%s732 + $0xc8] sm:$0xff] %v751
                %v753 = vld [vmem:[%s731 + $0x50] sm:$0xff]
                %754 = vst [vmem:[%s732 + $0xd0] sm:$0xff] %v753
                %v755 = vld [vmem:[%s731 + $0x58] sm:$0xff]
                %756 = vst [vmem:[%s732 + $0xd8] sm:$0xff] %v755
                %v757 = vld [vmem:[%s731 + $0x60] sm:$0xff]
                %758 = vst [vmem:[%s732 + $0x120] sm:$0xff] %v757
                %v759 = vld [vmem:[%s731 + $0x68] sm:$0xff]
                %760 = vst [vmem:[%s732 + $0x128] sm:$0xff] %v759
                %v761 = vld [vmem:[%s731 + $0x70] sm:$0xff]
                %762 = vst [vmem:[%s732 + $0x130] sm:$0xff] %v761
                %v763 = vld [vmem:[%s731 + $0x78] sm:$0xff]
                %764 = vst [vmem:[%s732 + $0x138] sm:$0xff] %v763
              $region72: #{cnn_forward.5} parent=66 // loop_footer
                %s730 = sadd.s32 1, %s726
              $region73: #{cnn_forward.5} parent=66 // loop_footer_branch
                %725 = sbr.rel target = $region69
              $region74: #{cnn_forward.5} parent=66 // loop_exit
                _
            $region67: #{cnn_forward.5} parent=62 // pred_fallthru
              _
            // Predicated region
            $region75: #{cnn_forward.5} parent=62 // pred_check
              _
            $region76: #{cnn_forward.5} parent=62 // pred_check_branch
              %766 = sbr.rel target = $region78
            $region77: #{cnn_forward.5} parent=62 // pred_region
              _
            $region78: #{cnn_forward.5} parent=62 // pred_fallthru
              _
          $region63: #{cnn_forward.5} parent=58 // pred_fallthru
            _
          %767 = vnop
        $region59: #{cnn_forward.5} parent=50 // pred_fallthru
          _
      $region51: #{cnn_forward.5} parent=5 // pred_fallthru
        _
      %p768 = scmp.le.s32.totalorder 2, %s9
      // Predicated region
      $region79: #{cnn_forward.5} parent=5 // pred_check
        %p769 = pneg %p768
      $region80: #{cnn_forward.5} parent=5 // pred_check_branch
        %771 = sbr.rel (%p769) target = $region82
      $region81: #{cnn_forward.5} parent=5 // pred_region
        %s772 = ssub.s32 %s9, 2
        // Predicated region
        $region83: #{cnn_forward.5} parent=81 // pred_check
          %p773 = pneg %p106
        $region84: #{cnn_forward.5} parent=81 // pred_check_branch
          %775 = sbr.rel (%p773) target = $region86
        $region85: #{cnn_forward.5} parent=81 // pred_region
          %s776 = sand.u32 %s91, 1
          %s777 = sand.u32 %s91, 1
          %s778 = smul.addr %s777, 128
          %s779 = scalar_lea.vmem [#allocation3], %s778
        $region86: #{cnn_forward.5} parent=81 // pred_fallthru
          _
      $region82: #{cnn_forward.5} parent=5 // pred_fallthru
        _
    $region6: #{cnn_forward.5} parent=1 // loop_footer
      %s13 = sadd.s32 1, %s9
    $region7: #{cnn_forward.5} parent=1 // loop_footer_branch
      %8 = sbr.rel target = $region3
    $region8: #{cnn_forward.5} parent=1 // loop_exit
      _

// kernel: cnn_forward.6
$region0: #{cnn_forward.6}
  #allocation0 [shape = 'u32[]', space=smem, size = 0x4, offset = 0x4, fixed_abs, tag = 'smem constant byte address 0x4 - core index']
  #allocation1 [shape = 'u32[72,128]{1,0:T(1,128)}', space=vmem, size = 0x9000, scoped, tag = 'internal scratch']
  %s0 = inlined_call_operand.vmem [shape: bf16[288,128], index: 0, kind: input, shape index: {}]
  %s1 = inlined_call_operand.vmem [shape: bf16[64,288], index: 1, kind: input, shape index: {}]
  %s2 = inlined_call_operand.vmem [shape: f32[64,1], index: 2, kind: input, shape index: {}]
  %s3 = inlined_call_operand.vmem [shape: f32[64,128], index: 3, kind: output, shape index: {}]
  %s4 = sld [smem:[#allocation0]]
  $region22: #{cnn_forward.6} parent=0
    _
  %s6 = ssub.s32 1, %s4
  %s7 = scalar_select 0, %s6, %s4
  // Predicated region
  $region2: #{cnn_forward.6} parent=0 // pred_check
    _
  $region3: #{cnn_forward.6} parent=0 // pred_check_branch
    %9 = sbr.rel (0) target = $region5
  $region4: #{cnn_forward.6} parent=0 // pred_region
    _
  $region5: #{cnn_forward.6} parent=0 // pred_fallthru
    _
  // Predicated region
  $region6: #{cnn_forward.6} parent=0 // pred_check
    _
  $region7: #{cnn_forward.6} parent=0 // pred_check_branch
    %11 = sbr.rel (0) target = $region9
  $region8: #{cnn_forward.6} parent=0 // pred_region
    _
  $region9: #{cnn_forward.6} parent=0 // pred_fallthru
    _
  // Predicated region
  $region10: #{cnn_forward.6} parent=0 // pred_check
    _
  $region11: #{cnn_forward.6} parent=0 // pred_check_branch
    %13 = sbr.rel (0) target = $region13
  $region12: #{cnn_forward.6} parent=0 // pred_region
    _
  $region13: #{cnn_forward.6} parent=0 // pred_fallthru
    _
  %v15 = vld [vmem:[%s1] sm:$0xff]
  %v16 = vld [vmem:[%s1 + $0x8] sm:$0xf]
  %v17 = vld [vmem:[%s1 + $0xc] sm:$0xff]
  %v18 = vld [vmem:[%s1 + $0x14] sm:$0xf]
  %v19 = vld [vmem:[%s1 + $0x18] sm:$0xff]
  %v20 = vld [vmem:[%s1 + $0x20] sm:$0xf]
  %v21 = vld [vmem:[%s1 + $0x24] sm:$0xff]
  %v22 = vld [vmem:[%s1 + $0x2c] sm:$0xf]
  %v23 = vld [vmem:[%s1 + $0x30] sm:$0xff]
  %v24 = vld [vmem:[%s1 + $0x38] sm:$0xf]
  %v25 = vld [vmem:[%s1 + $0x3c] sm:$0xff]
  %v26 = vld [vmem:[%s1 + $0x44] sm:$0xf]
  %v27 = vld [vmem:[%s1 + $0x48] sm:$0xff]
  %v28 = vld [vmem:[%s1 + $0x50] sm:$0xf]
  %v29 = vld [vmem:[%s1 + $0x54] sm:$0xff]
  %v30 = vld [vmem:[%s1 + $0x5c] sm:$0xf]
  %v31 = vld [vmem:[%s0] sm:$0xf]
  %v32 = vld [vmem:[%s0 + $0x4] sm:$0xf]
  %v33 = vld [vmem:[%s0 + $0x8] sm:$0xf]
  %v34 = vld [vmem:[%s0 + $0xc] sm:$0xf]
  %v35 = vld [vmem:[%s0 + $0x10] sm:$0xf]
  %v36 = vld [vmem:[%s0 + $0x14] sm:$0xf]
  %v37 = vld [vmem:[%s0 + $0x18] sm:$0xf]
  %v38 = vld [vmem:[%s0 + $0x1c] sm:$0xf]
  %v39 = vld [vmem:[%s0 + $0x20] sm:$0xf]
  %v40 = vld [vmem:[%s0 + $0x24] sm:$0xf]
  %v41 = vld [vmem:[%s0 + $0x28] sm:$0xf]
  %v42 = vld [vmem:[%s0 + $0x2c] sm:$0xf]
  %v43 = vld [vmem:[%s0 + $0x30] sm:$0xf]
  %v44 = vld [vmem:[%s0 + $0x34] sm:$0xf]
  %v45 = vld [vmem:[%s0 + $0x38] sm:$0xf]
  %v46 = vld [vmem:[%s0 + $0x3c] sm:$0xf]
  %v47 = vld [vmem:[%s0 + $0x40] sm:$0xf]
  %v48 = vld [vmem:[%s0 + $0x44] sm:$0xf]
  %v49 = vld [vmem:[%s0 + $0x48] sm:$0xf]
  %v50 = vld [vmem:[%s0 + $0x4c] sm:$0xf]
  %v51 = vld [vmem:[%s0 + $0x50] sm:$0xf]
  %v52 = vld [vmem:[%s0 + $0x54] sm:$0xf]
  %v53 = vld [vmem:[%s0 + $0x58] sm:$0xf]
  %v54 = vld [vmem:[%s0 + $0x5c] sm:$0xf]
  %v55 = vld [vmem:[%s0 + $0x60] sm:$0xf]
  %v56 = vld [vmem:[%s0 + $0x64] sm:$0xf]
  %v57 = vld [vmem:[%s0 + $0x68] sm:$0xf]
  %v58 = vld [vmem:[%s0 + $0x6c] sm:$0xf]
  %v59 = vld [vmem:[%s0 + $0x70] sm:$0xf]
  %v60 = vld [vmem:[%s0 + $0x74] sm:$0xf]
  %v61 = vld [vmem:[%s0 + $0x78] sm:$0xf]
  %v62 = vld [vmem:[%s0 + $0x7c] sm:$0xf]
  %v63 = vld [vmem:[%s0 + $0x80] sm:$0xf]
  %v64 = vld [vmem:[%s0 + $0x84] sm:$0xf]
  %v65 = vld [vmem:[%s0 + $0x88] sm:$0xf]
  %v66 = vld [vmem:[%s0 + $0x8c] sm:$0xf]
  %v67 = vld [vmem:[%s2] sm:$0xff]
  %v68 = vld [vmem:[%s2 + $0x8] sm:$0xff]
  %v69 = vld [vmem:[%s2 + $0x10] sm:$0xff]
  %v70 = vld [vmem:[%s2 + $0x18] sm:$0xff]
  %v71 = vld [vmem:[%s2 + $0x20] sm:$0xff]
  %v72 = vld [vmem:[%s2 + $0x28] sm:$0xff]
  %v73 = vld [vmem:[%s2 + $0x30] sm:$0xff]
  %v74 = vld [vmem:[%s2 + $0x38] sm:$0xff]
  %76 = vset.pattern.permute.xlu0 0
  %77 = vperm.xlu0 %76, %v67
  %v78 = vpop.permute.xlu0 %77
  %81 = vset.pattern.permute.xlu0 0
  %82 = vperm.xlu0 %81, %v68
  %v83 = vpop.permute.xlu0 %82
  %86 = vset.pattern.permute.xlu0 0
  %87 = vperm.xlu0 %86, %v69
  %v88 = vpop.permute.xlu0 %87
  %91 = vset.pattern.permute.xlu0 0
  %92 = vperm.xlu0 %91, %v70
  %v93 = vpop.permute.xlu0 %92
  %96 = vset.pattern.permute.xlu0 0
  %97 = vperm.xlu0 %96, %v71
  %v98 = vpop.permute.xlu0 %97
  %101 = vset.pattern.permute.xlu0 0
  %102 = vperm.xlu0 %101, %v72
  %v103 = vpop.permute.xlu0 %102
  %106 = vset.pattern.permute.xlu0 0
  %107 = vperm.xlu0 %106, %v73
  %v108 = vpop.permute.xlu0 %107
  %111 = vset.pattern.permute.xlu0 0
  %112 = vperm.xlu0 %111, %v74
  %v113 = vpop.permute.xlu0 %112
  %v131 = vunpack.c.l.b16 %v15
  %v132 = vunpack.c.h.b16 %v15
  %v133 = vunpack.c.l.b16 %v16
  %v134 = vunpack.c.l.b16 %v17
  %v135 = vunpack.c.h.b16 %v17
  %v136 = vunpack.c.l.b16 %v18
  %v137 = vunpack.c.l.b16 %v19
  %v138 = vunpack.c.h.b16 %v19
  %v139 = vunpack.c.l.b16 %v20
  %v140 = vunpack.c.l.b16 %v21
  %v141 = vunpack.c.h.b16 %v21
  %v142 = vunpack.c.l.b16 %v22
  %v143 = vunpack.c.l.b16 %v23
  %v144 = vunpack.c.h.b16 %v23
  %v145 = vunpack.c.l.b16 %v24
  %v146 = vunpack.c.l.b16 %v25
  %v147 = vunpack.c.h.b16 %v25
  %v148 = vunpack.c.l.b16 %v26
  %v149 = vunpack.c.l.b16 %v27
  %v150 = vunpack.c.h.b16 %v27
  %v151 = vunpack.c.l.b16 %v28
  %v152 = vunpack.c.l.b16 %v29
  %v153 = vunpack.c.h.b16 %v29
  %v154 = vunpack.c.l.b16 %v30
  %v155 = vpack.c.b16 %v134, %v131
  %v156 = vpack.c.b16 %v135, %v132
  %v157 = vpack.c.b16 %v136, %v133
  %v158 = vpack.c.b16 %v140, %v137
  %v159 = vpack.c.b16 %v141, %v138
  %v160 = vpack.c.b16 %v142, %v139
  %v161 = vpack.c.b16 %v146, %v143
  %v162 = vpack.c.b16 %v147, %v144
  %v163 = vpack.c.b16 %v148, %v145
  %v164 = vpack.c.b16 %v152, %v149
  %v165 = vpack.c.b16 %v153, %v150
  %v166 = vpack.c.b16 %v154, %v151
  %v211 = vunpack.c.l.b16 %v31
  %v212 = vunpack.c.l.b16 %v32
  %v213 = vunpack.c.l.b16 %v33
  %v214 = vunpack.c.l.b16 %v34
  %v215 = vunpack.c.l.b16 %v35
  %v216 = vunpack.c.l.b16 %v36
  %v217 = vunpack.c.l.b16 %v37
  %v218 = vunpack.c.l.b16 %v38
  %v219 = vunpack.c.l.b16 %v39
  %v220 = vunpack.c.l.b16 %v40
  %v221 = vunpack.c.l.b16 %v41
  %v222 = vunpack.c.l.b16 %v42
  %v223 = vunpack.c.l.b16 %v43
  %v224 = vunpack.c.l.b16 %v44
  %v225 = vunpack.c.l.b16 %v45
  %v226 = vunpack.c.l.b16 %v46
  %v227 = vunpack.c.l.b16 %v47
  %v228 = vunpack.c.l.b16 %v48
  %v229 = vunpack.c.l.b16 %v49
  %v230 = vunpack.c.l.b16 %v50
  %v231 = vunpack.c.l.b16 %v51
  %v232 = vunpack.c.l.b16 %v52
  %v233 = vunpack.c.l.b16 %v53
  %v234 = vunpack.c.l.b16 %v54
  %v235 = vunpack.c.l.b16 %v55
  %v236 = vunpack.c.l.b16 %v56
  %v237 = vunpack.c.l.b16 %v57
  %v238 = vunpack.c.l.b16 %v58
  %v239 = vunpack.c.l.b16 %v59
  %v240 = vunpack.c.l.b16 %v60
  %v241 = vunpack.c.l.b16 %v61
  %v242 = vunpack.c.l.b16 %v62
  %v243 = vunpack.c.l.b16 %v63
  %v244 = vunpack.c.l.b16 %v64
  %v245 = vunpack.c.l.b16 %v65
  %v246 = vunpack.c.l.b16 %v66
  %v247 = vpack.c.b16 %v212, %v211
  %v248 = vpack.c.b16 %v214, %v213
  %v249 = vpack.c.b16 %v216, %v215
  %v250 = vpack.c.b16 %v218, %v217
  %v251 = vpack.c.b16 %v220, %v219
  %v252 = vpack.c.b16 %v222, %v221
  %v253 = vpack.c.b16 %v224, %v223
  %v254 = vpack.c.b16 %v226, %v225
  %v255 = vpack.c.b16 %v228, %v227
  %v256 = vpack.c.b16 %v230, %v229
  %v257 = vpack.c.b16 %v232, %v231
  %v258 = vpack.c.b16 %v234, %v233
  %v259 = vpack.c.b16 %v236, %v235
  %v260 = vpack.c.b16 %v238, %v237
  %v261 = vpack.c.b16 %v240, %v239
  %v262 = vpack.c.b16 %v242, %v241
  %v263 = vpack.c.b16 %v244, %v243
  %v264 = vpack.c.b16 %v246, %v245
  %vm283 = vcmask 261120
  %v285 = vsel %vm283, %v157, 0
  %v288 = vsel %vm283, %v160, 0
  %v291 = vsel %vm283, %v163, 0
  %v294 = vsel %vm283, %v166, 0
  %296 = vmatpush.bf16.msra.mxu0 %v254
  %297 = vmatpush.bf16.msra.mxu0 %v253
  %298 = vmatpush.bf16.msra.mxu0 %v252
  %299 = vmatpush.bf16.msra.mxu0 %v251
  %300 = vmatpush.bf16.msra.mxu0 %v250
  %301 = vmatpush.bf16.msra.mxu0 %v249
  %302 = vmatpush.bf16.msra.mxu0 %v248
  %303 = vmatpush.bf16.msra.mxu0 %v247
  %304 = vmatmul.bf16.gmra.mxu0 %v155
  %v305 = vpop.f32.mrf.mxu0
  %v306 = vadd.f32 %v78, %v305
  %v307 = vpop.f32.mrf.mxu0
  %v308 = vadd.f32 %v83, %v307
  %309 = vmatmul.bf16.gmra.mxu0 %v158
  %v310 = vpop.f32.mrf.mxu0
  %v311 = vadd.f32 %v88, %v310
  %v312 = vpop.f32.mrf.mxu0
  %v313 = vadd.f32 %v93, %v312
  %314 = vmatmul.bf16.gmra.mxu0 %v161
  %v315 = vpop.f32.mrf.mxu0
  %v316 = vadd.f32 %v98, %v315
  %v317 = vpop.f32.mrf.mxu0
  %v318 = vadd.f32 %v103, %v317
  %319 = vmatmul.bf16.gmra.mxu0 %v164
  %v320 = vpop.f32.mrf.mxu0
  %v321 = vadd.f32 %v108, %v320
  %v322 = vpop.f32.mrf.mxu0
  %v323 = vadd.f32 %v113, %v322
  %324 = vdwg.mxu0
  %325 = vmatpush.bf16.msra.mxu0 %v262
  %326 = vmatpush.bf16.msra.mxu0 %v261
  %327 = vmatpush.bf16.msra.mxu0 %v260
  %328 = vmatpush.bf16.msra.mxu0 %v259
  %329 = vmatpush.bf16.msra.mxu0 %v258
  %330 = vmatpush.bf16.msra.mxu0 %v257
  %331 = vmatpush.bf16.msra.mxu0 %v256
  %332 = vmatpush.bf16.msra.mxu0 %v255
  %333 = vmatmul.bf16.gmra.mxu0 %v156
  %v334 = vpop.f32.mrf.mxu0
  %v335 = vadd.f32 %v306, %v334
  %v336 = vpop.f32.mrf.mxu0
  %v337 = vadd.f32 %v308, %v336
  %338 = vmatmul.bf16.gmra.mxu0 %v159
  %v339 = vpop.f32.mrf.mxu0
  %v340 = vadd.f32 %v311, %v339
  %v341 = vpop.f32.mrf.mxu0
  %v342 = vadd.f32 %v313, %v341
  %343 = vmatmul.bf16.gmra.mxu0 %v162
  %v344 = vpop.f32.mrf.mxu0
  %v345 = vadd.f32 %v316, %v344
  %v346 = vpop.f32.mrf.mxu0
  %v347 = vadd.f32 %v318, %v346
  %348 = vmatmul.bf16.gmra.mxu0 %v165
  %v349 = vpop.f32.mrf.mxu0
  %v350 = vadd.f32 %v321, %v349
  %v351 = vpop.f32.mrf.mxu0
  %v352 = vadd.f32 %v323, %v351
  %353 = vdwg.mxu0
  %354 = vmatpush.bf16.msra.mxu0 0
  %355 = vmatpush.bf16.msra.mxu0 0
  %356 = vmatpush.bf16.msra.mxu0 0
  %357 = vmatpush.bf16.msra.mxu0 0
  %358 = vmatpush.bf16.msra.mxu0 0
  %359 = vmatpush.bf16.msra.mxu0 0
  %360 = vmatpush.bf16.msra.mxu0 %v264
  %361 = vmatpush.bf16.msra.mxu0 %v263
  %362 = vmatmul.bf16.gmra.mxu0 %v285
  %v363 = vpop.f32.mrf.mxu0
  %v364 = vadd.f32 %v335, %v363
  %v365 = vpop.f32.mrf.mxu0
  %v366 = vadd.f32 %v337, %v365
  %367 = vmatmul.bf16.gmra.mxu0 %v288
  %v368 = vpop.f32.mrf.mxu0
  %v369 = vadd.f32 %v340, %v368
  %v370 = vpop.f32.mrf.mxu0
  %v371 = vadd.f32 %v342, %v370
  %372 = vmatmul.bf16.gmra.mxu0 %v291
  %v373 = vpop.f32.mrf.mxu0
  %v374 = vadd.f32 %v345, %v373
  %v375 = vpop.f32.mrf.mxu0
  %v376 = vadd.f32 %v347, %v375
  %377 = vmatmul.bf16.gmra.mxu0 %v294
  %v378 = vpop.f32.mrf.mxu0
  %v379 = vadd.f32 %v350, %v378
  %v380 = vpop.f32.mrf.mxu0
  %v381 = vadd.f32 %v352, %v380
  %382 = vdwg.mxu0
  %v383 = vmax.f32 %v364, 0.0
  %v384 = vmax.f32 %v366, 0.0
  %v385 = vmax.f32 %v369, 0.0
  %v386 = vmax.f32 %v371, 0.0
  %v387 = vmax.f32 %v374, 0.0
  %v388 = vmax.f32 %v376, 0.0
  %v389 = vmax.f32 %v379, 0.0
  %v390 = vmax.f32 %v381, 0.0
  %391 = vst [vmem:[%s3] sm:$0xff] %v383
  %392 = vst [vmem:[%s3 + $0x8] sm:$0xff] %v384
  %393 = vst [vmem:[%s3 + $0x10] sm:$0xff] %v385
  %394 = vst [vmem:[%s3 + $0x18] sm:$0xff] %v386
  %395 = vst [vmem:[%s3 + $0x20] sm:$0xff] %v387
  %396 = vst [vmem:[%s3 + $0x28] sm:$0xff] %v388
  %397 = vst [vmem:[%s3 + $0x30] sm:$0xff] %v389
  %398 = vst [vmem:[%s3 + $0x38] sm:$0xff] %v390
  // Predicated region
  $region14: #{cnn_forward.6} parent=0 // pred_check
    _
  $region15: #{cnn_forward.6} parent=0 // pred_check_branch
    %400 = sbr.rel (0) target = $region17
  $region16: #{cnn_forward.6} parent=0 // pred_region
    _
  $region17: #{cnn_forward.6} parent=0 // pred_fallthru
    _
  // Predicated region
  $region18: #{cnn_forward.6} parent=0 // pred_check
    _
  $region19: #{cnn_forward.6} parent=0 // pred_check_branch
    %402 = sbr.rel (0) target = $region21
  $region20: #{cnn_forward.6} parent=0 // pred_region
    _
  $region21: #{cnn_forward.6} parent=0 // pred_fallthru
    _

// kernel: cnn_forward.7
$region0: #{cnn_forward.7}
  #allocation0 [shape = 'u32[]', space=smem, size = 0x4, offset = 0x4, fixed_abs, tag = 'smem constant byte address 0x4 - core index']
  #allocation1 [shape = 'u32[72,128]{1,0:T(1,128)}', space=vmem, size = 0x9000, scoped, tag = 'internal scratch']
  %s0 = inlined_call_operand.vmem [shape: f32[2,576], index: 0, kind: input, shape index: {}]
  %s1 = inlined_call_operand.vmem [shape: f32[576,10], index: 1, kind: input, shape index: {}]
  %s2 = inlined_call_operand.vmem [shape: f32[1,10], index: 2, kind: input, shape index: {}]
  %s3 = inlined_call_operand.vmem [shape: f32[10,2], index: 3, kind: input, shape index: {}]
  %s4 = inlined_call_operand.vmem [shape: f32[1,2], index: 4, kind: input, shape index: {}]
  %s5 = inlined_call_operand.hbm [shape: f32[2,2], index: 5, kind: output, shape index: {}]
  %s6 = sld [smem:[#allocation0]]
  $region30: #{cnn_forward.7} parent=0
    _
  %s8 = ssub.s32 1, %s6
  %s9 = scalar_select 0, %s8, %s6
  $region1: #{cnn_forward.7} parent=0
    #allocation2 [shape = 'u8[1024]{0}', space=vmem, size = 0x400, scoped, tag = 'output window, operand 0, single buffered']
    #allocation3 [shape = 's32[1]{0}', space=sflag, size = 0x4, scoped, tag = 'scoped memory for cnn_forward.7']
    %10 = vsyncpa [#allocation3], 0
    // Predicated region
    $region2: #{cnn_forward.7} parent=1 // pred_check
      _
    $region3: #{cnn_forward.7} parent=1 // pred_check_branch
      %12 = sbr.rel (0) target = $region5
    $region4: #{cnn_forward.7} parent=1 // pred_region
      _
    $region5: #{cnn_forward.7} parent=1 // pred_fallthru
      _
    // Predicated region
    $region6: #{cnn_forward.7} parent=1 // pred_check
      _
    $region7: #{cnn_forward.7} parent=1 // pred_check_branch
      %14 = sbr.rel (0) target = $region9
    $region8: #{cnn_forward.7} parent=1 // pred_region
      _
    $region9: #{cnn_forward.7} parent=1 // pred_fallthru
      _
    // Predicated region
    $region10: #{cnn_forward.7} parent=1 // pred_check
      _
    $region11: #{cnn_forward.7} parent=1 // pred_check_branch
      %16 = sbr.rel (0) target = $region13
    $region12: #{cnn_forward.7} parent=1 // pred_region
      _
    $region13: #{cnn_forward.7} parent=1 // pred_fallthru
      _
    // Predicated region
    $region14: #{cnn_forward.7} parent=1 // pred_check
      _
    $region15: #{cnn_forward.7} parent=1 // pred_check_branch
      %18 = sbr.rel (0) target = $region17
    $region16: #{cnn_forward.7} parent=1 // pred_region
      _
    $region17: #{cnn_forward.7} parent=1 // pred_fallthru
      _
    // Predicated region
    $region18: #{cnn_forward.7} parent=1 // pred_check
      _
    $region19: #{cnn_forward.7} parent=1 // pred_check_branch
      %20 = sbr.rel (0) target = $region21
    $region20: #{cnn_forward.7} parent=1 // pred_region
      _
    $region21: #{cnn_forward.7} parent=1 // pred_fallthru
      _
    %v21 = vld [vmem:[%s0] sm:$0xff]
    %v22 = vld [vmem:[%s0 + $0x8] sm:$0x3]
    %v23 = vld [vmem:[%s1] sm:$0xff]
    %v24 = vld [vmem:[%s1 + $0x8] sm:$0xff]
    %v25 = vld [vmem:[%s1 + $0x10] sm:$0xff]
    %v26 = vld [vmem:[%s1 + $0x18] sm:$0xff]
    %v27 = vld [vmem:[%s1 + $0x20] sm:$0xff]
    %v28 = vld [vmem:[%s1 + $0x28] sm:$0xff]
    %v29 = vld [vmem:[%s1 + $0x30] sm:$0xff]
    %v30 = vld [vmem:[%s1 + $0x38] sm:$0xff]
    %v31 = vld [vmem:[%s1 + $0x40] sm:$0xff]
    %v32 = vld [vmem:[%s1 + $0x48] sm:$0xff]
    %v33 = vld [vmem:[%s1 + $0x50] sm:$0xff]
    %v34 = vld [vmem:[%s1 + $0x58] sm:$0xff]
    %v35 = vld [vmem:[%s1 + $0x60] sm:$0xff]
    %v36 = vld [vmem:[%s1 + $0x68] sm:$0xff]
    %v37 = vld [vmem:[%s1 + $0x70] sm:$0xff]
    %v38 = vld [vmem:[%s1 + $0x78] sm:$0xff]
    %v39 = vld [vmem:[%s1 + $0x80] sm:$0xff]
    %v40 = vld [vmem:[%s1 + $0x88] sm:$0xff]
    %v41 = vld [vmem:[%s1 + $0x90] sm:$0xff]
    %v42 = vld [vmem:[%s1 + $0x98] sm:$0xff]
    %v43 = vld [vmem:[%s1 + $0xa0] sm:$0xff]
    %v44 = vld [vmem:[%s1 + $0xa8] sm:$0xff]
    %v45 = vld [vmem:[%s1 + $0xb0] sm:$0xff]
    %v46 = vld [vmem:[%s1 + $0xb8] sm:$0xff]
    %v47 = vld [vmem:[%s1 + $0xc0] sm:$0xff]
    %v48 = vld [vmem:[%s1 + $0xc8] sm:$0xff]
    %v49 = vld [vmem:[%s1 + $0xd0] sm:$0xff]
    %v50 = vld [vmem:[%s1 + $0xd8] sm:$0xff]
    %v51 = vld [vmem:[%s1 + $0xe0] sm:$0xff]
    %v52 = vld [vmem:[%s1 + $0xe8] sm:$0xff]
    %v53 = vld [vmem:[%s1 + $0xf0] sm:$0xff]
    %v54 = vld [vmem:[%s1 + $0xf8] sm:$0xff]
    %v55 = vld [vmem:[%s1 + $0x100] sm:$0xff]
    %v56 = vld [vmem:[%s1 + $0x108] sm:$0xff]
    %v57 = vld [vmem:[%s1 + $0x110] sm:$0xff]
    %v58 = vld [vmem:[%s1 + $0x118] sm:$0xff]
    %v59 = vld [vmem:[%s1 + $0x120] sm:$0xff]
    %v60 = vld [vmem:[%s1 + $0x128] sm:$0xff]
    %v61 = vld [vmem:[%s1 + $0x130] sm:$0xff]
    %v62 = vld [vmem:[%s1 + $0x138] sm:$0xff]
    %v63 = vld [vmem:[%s1 + $0x140] sm:$0xff]
    %v64 = vld [vmem:[%s1 + $0x148] sm:$0xff]
    %v65 = vld [vmem:[%s1 + $0x150] sm:$0xff]
    %v66 = vld [vmem:[%s1 + $0x158] sm:$0xff]
    %v67 = vld [vmem:[%s1 + $0x160] sm:$0xff]
    %v68 = vld [vmem:[%s1 + $0x168] sm:$0xff]
    %v69 = vld [vmem:[%s1 + $0x170] sm:$0xff]
    %v70 = vld [vmem:[%s1 + $0x178] sm:$0xff]
    %v71 = vld [vmem:[%s1 + $0x180] sm:$0xff]
    %v72 = vld [vmem:[%s1 + $0x188] sm:$0xff]
    %v73 = vld [vmem:[%s1 + $0x190] sm:$0xff]
    %v74 = vld [vmem:[%s1 + $0x198] sm:$0xff]
    %v75 = vld [vmem:[%s1 + $0x1a0] sm:$0xff]
    %v76 = vld [vmem:[%s1 + $0x1a8] sm:$0xff]
    %v77 = vld [vmem:[%s1 + $0x1b0] sm:$0xff]
    %v78 = vld [vmem:[%s1 + $0x1b8] sm:$0xff]
    %v79 = vld [vmem:[%s1 + $0x1c0] sm:$0xff]
    %v80 = vld [vmem:[%s1 + $0x1c8] sm:$0xff]
    %v81 = vld [vmem:[%s1 + $0x1d0] sm:$0xff]
    %v82 = vld [vmem:[%s1 + $0x1d8] sm:$0xff]
    %v83 = vld [vmem:[%s1 + $0x1e0] sm:$0xff]
    %v84 = vld [vmem:[%s1 + $0x1e8] sm:$0xff]
    %v85 = vld [vmem:[%s1 + $0x1f0] sm:$0xff]
    %v86 = vld [vmem:[%s1 + $0x1f8] sm:$0xff]
    %v87 = vld [vmem:[%s1 + $0x200] sm:$0xff]
    %v88 = vld [vmem:[%s1 + $0x208] sm:$0xff]
    %v89 = vld [vmem:[%s1 + $0x210] sm:$0xff]
    %v90 = vld [vmem:[%s1 + $0x218] sm:$0xff]
    %v91 = vld [vmem:[%s1 + $0x220] sm:$0xff]
    %v92 = vld [vmem:[%s1 + $0x228] sm:$0xff]
    %v93 = vld [vmem:[%s1 + $0x230] sm:$0xff]
    %v94 = vld [vmem:[%s1 + $0x238] sm:$0xff]
    %v95 = vld [vmem:[%s2] sm:$0x1]
    %v97 = vperm.slane %v95, 0
    %101 = vst [vmem:[#allocation1] ss:$4 sm:$0xff] %v21
    %s102 = scalar_lea.vmem [#allocation1], 32
    %103 = vst [vmem:[%s102] ss:$4 sm:$0xff] %v22
    %v104 = vld.sshfl [vmem:[#allocation1] sm:$0xff pattern:$0x73625140]
    %v105 = vld.sshfl [vmem:[#allocation1 + $0x8] sm:$0xff pattern:$0x73625140]
    %v106 = vld.sshfl [vmem:[#allocation1 + $0x10] sm:$0xff pattern:$0x73625140]
    %v107 = vld.sshfl [vmem:[#allocation1 + $0x18] sm:$0xff pattern:$0x73625140]
    %v108 = vld.sshfl [vmem:[#allocation1 + $0x20] sm:$0xff pattern:$0x73625140]
    %vm113 = vcmask 523264
    %v114 = vsel %vm113, %v108, 0
    %116 = vmatpush.msra.mxu0 %v38
    %117 = vmatpush.msra.mxu0 %v37
    %118 = vmatpush.msra.mxu0 %v36
    %119 = vmatpush.msra.mxu0 %v35
    %120 = vmatpush.msra.mxu0 %v34
    %121 = vmatpush.msra.mxu0 %v33
    %122 = vmatpush.msra.mxu0 %v32
    %123 = vmatpush.msra.mxu0 %v31
    %124 = vmatpush.msra.mxu0 %v30
    %125 = vmatpush.msra.mxu0 %v29
    %126 = vmatpush.msra.mxu0 %v28
    %127 = vmatpush.msra.mxu0 %v27
    %128 = vmatpush.msra.mxu0 %v26
    %129 = vmatpush.msra.mxu0 %v25
    %130 = vmatpush.msra.mxu0 %v24
    %131 = vmatpush.msra.mxu0 %v23
    %132 = vmatmul.f32.gmra.mxu0 %v104
    %v133 = vpop.f32.mrf.mxu0
    %v134 = vadd.f32 %v97, %v133
    %135 = vdwg.mxu0
    %136 = vmatpush.msra.mxu0 %v54
    %137 = vmatpush.msra.mxu0 %v53
    %138 = vmatpush.msra.mxu0 %v52
    %139 = vmatpush.msra.mxu0 %v51
    %140 = vmatpush.msra.mxu0 %v50
    %141 = vmatpush.msra.mxu0 %v49
    %142 = vmatpush.msra.mxu0 %v48
    %143 = vmatpush.msra.mxu0 %v47
    %144 = vmatpush.msra.mxu0 %v46
    %145 = vmatpush.msra.mxu0 %v45
    %146 = vmatpush.msra.mxu0 %v44
    %147 = vmatpush.msra.mxu0 %v43
    %148 = vmatpush.msra.mxu0 %v42
    %149 = vmatpush.msra.mxu0 %v41
    %150 = vmatpush.msra.mxu0 %v40
    %151 = vmatpush.msra.mxu0 %v39
    %152 = vmatmul.f32.gmra.mxu0 %v105
    %v153 = vpop.f32.mrf.mxu0
    %v154 = vadd.f32 %v134, %v153
    %155 = vdwg.mxu0
    %156 = vmatpush.msra.mxu0 %v70
    %157 = vmatpush.msra.mxu0 %v69
    %158 = vmatpush.msra.mxu0 %v68
    %159 = vmatpush.msra.mxu0 %v67
    %160 = vmatpush.msra.mxu0 %v66
    %161 = vmatpush.msra.mxu0 %v65
    %162 = vmatpush.msra.mxu0 %v64
    %163 = vmatpush.msra.mxu0 %v63
    %164 = vmatpush.msra.mxu0 %v62
    %165 = vmatpush.msra.mxu0 %v61
    %166 = vmatpush.msra.mxu0 %v60
    %167 = vmatpush.msra.mxu0 %v59
    %168 = vmatpush.msra.mxu0 %v58
    %169 = vmatpush.msra.mxu0 %v57
    %170 = vmatpush.msra.mxu0 %v56
    %171 = vmatpush.msra.mxu0 %v55
    %172 = vmatmul.f32.gmra.mxu0 %v106
    %v173 = vpop.f32.mrf.mxu0
    %v174 = vadd.f32 %v154, %v173
    %175 = vdwg.mxu0
    %176 = vmatpush.msra.mxu0 %v86
    %177 = vmatpush.msra.mxu0 %v85
    %178 = vmatpush.msra.mxu0 %v84
    %179 = vmatpush.msra.mxu0 %v83
    %180 = vmatpush.msra.mxu0 %v82
    %181 = vmatpush.msra.mxu0 %v81
    %182 = vmatpush.msra.mxu0 %v80
    %183 = vmatpush.msra.mxu0 %v79
    %184 = vmatpush.msra.mxu0 %v78
    %185 = vmatpush.msra.mxu0 %v77
    %186 = vmatpush.msra.mxu0 %v76
    %187 = vmatpush.msra.mxu0 %v75
    %188 = vmatpush.msra.mxu0 %v74
    %189 = vmatpush.msra.mxu0 %v73
    %190 = vmatpush.msra.mxu0 %v72
    %191 = vmatpush.msra.mxu0 %v71
    %192 = vmatmul.f32.gmra.mxu0 %v107
    %v193 = vpop.f32.mrf.mxu0
    %v194 = vadd.f32 %v174, %v193
    %195 = vdwg.mxu0
    %196 = vmatpush.msra.mxu0 0.0
    %197 = vmatpush.msra.mxu0 0.0
    %198 = vmatpush.msra.mxu0 0.0
    %199 = vmatpush.msra.mxu0 0.0
    %200 = vmatpush.msra.mxu0 0.0
    %201 = vmatpush.msra.mxu0 0.0
    %202 = vmatpush.msra.mxu0 0.0
    %203 = vmatpush.msra.mxu0 0.0
    %204 = vmatpush.msra.mxu0 %v94
    %205 = vmatpush.msra.mxu0 %v93
    %206 = vmatpush.msra.mxu0 %v92
    %207 = vmatpush.msra.mxu0 %v91
    %208 = vmatpush.msra.mxu0 %v90
    %209 = vmatpush.msra.mxu0 %v89
    %210 = vmatpush.msra.mxu0 %v88
    %211 = vmatpush.msra.mxu0 %v87
    %212 = vmatmul.f32.gmra.mxu0 %v114
    %v213 = vpop.f32.mrf.mxu0
    %v214 = vadd.f32 %v194, %v213
    %215 = vdwg.mxu0
    %v216 = vmax.f32 %v214, 0.0
    %v217 = vld [vmem:[%s3] sm:$0xff]
    %v218 = vld [vmem:[%s3 + $0x8] sm:$0x3]
    %v219 = vld [vmem:[%s4] sm:$0x1]
    %v221 = vperm.slane %v219, 0
    %vm223 = vcmask 80896
    %v225 = vsel %vm223, %v216, 0
    %vm227 = vcmask 1041408
    %v229 = vsel %vm227, %v218, 0
    %231 = vmatpush.msra.mxu0 0.0
    %232 = vmatpush.msra.mxu0 0.0
    %233 = vmatpush.msra.mxu0 0.0
    %234 = vmatpush.msra.mxu0 0.0
    %235 = vmatpush.msra.mxu0 0.0
    %236 = vmatpush.msra.mxu0 0.0
    %237 = vmatpush.msra.mxu0 0.0
    %238 = vmatpush.msra.mxu0 0.0
    %239 = vmatpush.msra.mxu0 0.0
    %240 = vmatpush.msra.mxu0 0.0
    %241 = vmatpush.msra.mxu0 0.0
    %242 = vmatpush.msra.mxu0 0.0
    %243 = vmatpush.msra.mxu0 0.0
    %244 = vmatpush.msra.mxu0 0.0
    %245 = vmatpush.msra.mxu0 %v229
    %246 = vmatpush.msra.mxu0 %v217
    %247 = vmatmul.f32.gmra.mxu0 %v225
    %v248 = vpop.f32.mrf.mxu0
    %v249 = vadd.f32 %v221, %v248
    %250 = vdwg.mxu0
    %vm251 = vcmask 9216
    %252 = vst.msk [vmem:[#allocation2] sm:$0x3] %vm251, %v249
    // Predicated region
    $region22: #{cnn_forward.7} parent=1 // pred_check
      _
    $region23: #{cnn_forward.7} parent=1 // pred_check_branch
      %254 = sbr.rel (0) target = $region25
    $region24: #{cnn_forward.7} parent=1 // pred_region
      %256 = vsyncadd [#allocation3], 0
      %s258 = sshll.u32 [#allocation2], 4
      %s259 = int_to_ptr.vmem [resolvable:$true] %s258
      %s260 = sshll.u32 %s5, 4
      %s261 = int_to_ptr.hbm [resolvable:$true] %s260
      %263 = dma.vmem_to_hbm [thread:$0]  %s259, 32, %s261, [#allocation3]
    $region25: #{cnn_forward.7} parent=1 // pred_fallthru
      _
    // Predicated region
    $region26: #{cnn_forward.7} parent=1 // pred_check
      _
    $region27: #{cnn_forward.7} parent=1 // pred_check_branch
      %265 = sbr.rel (0) target = $region29
    $region28: #{cnn_forward.7} parent=1 // pred_region
      %267 = dma.done [#allocation3], 32
    $region29: #{cnn_forward.7} parent=1 // pred_fallthru
      _
    %268 = vsyncpa [#allocation3], 1

</llo_original>
